<compile_context>
chip_gen: v6e
topology: v6e:2x2x1
jax: 0.10.0
libtpu: 0.0.40
codegen_flags: <defaults>
</compile_context>

<pallas_src>
import functools

import jax
import jax.numpy as jnp
from jax.experimental import pallas as pl
from jax.experimental.pallas import tpu as pltpu


def _round_up(x, m):
    return ((x + m - 1) // m) * m


def _gcn_layer_kernel(g_ref, e_ref, s_ref, new_ref, sum_ref, acc_ref):
    """Intermediate layer: new = graph @ emb ; sum = sum_in + new."""
    k = pl.program_id(2)

    @pl.when(k == 0)
    def _():
        acc_ref[...] = jnp.zeros_like(acc_ref)

    acc_ref[...] += jnp.dot(
        g_ref[...], e_ref[...], preferred_element_type=jnp.float32
    )

    @pl.when(k == pl.num_programs(2) - 1)
    def _():
        acc = acc_ref[...]
        new_ref[...] = acc.astype(new_ref.dtype)
        sum_ref[...] = (s_ref[...] + acc).astype(sum_ref.dtype)


def _gcn_final_kernel(g_ref, e_ref, s_ref, sum_ref, acc_ref, *, inv_scale):
    """Final layer: sum = (sum_in + graph @ emb) * 1/(L+1); no new-emb write."""
    k = pl.program_id(2)

    @pl.when(k == 0)
    def _():
        acc_ref[...] = jnp.zeros_like(acc_ref)

    acc_ref[...] += jnp.dot(
        g_ref[...], e_ref[...], preferred_element_type=jnp.float32
    )

    @pl.when(k == pl.num_programs(2) - 1)
    def _():
        sum_ref[...] = ((s_ref[...] + acc_ref[...]) * inv_scale).astype(sum_ref.dtype)


def _gcn_layer(graph, emb, run_sum, *, is_last, inv_scale, tm, tn, tk):
    """graph: (Np, Np), emb/run_sum: (Np, Ep); dims are multiples of the tiles."""
    n_pad = graph.shape[0]
    e_pad = emb.shape[1]
    grid = (n_pad // tm, e_pad // tn, n_pad // tk)

    n_out = 1 if is_last else 2
    cost = pl.CostEstimate(
        flops=2 * n_pad * n_pad * e_pad,
        transcendentals=0,
        bytes_accessed=4 * (
            n_pad * n_pad * (e_pad // tn)      # graph, re-read once per column tile
            + n_pad * e_pad * (n_pad // tm)    # emb, re-read once per row tile
            + n_pad * e_pad                    # running-sum read
            + n_pad * e_pad * n_out            # outputs
        ),
    )

    in_specs = [
        pl.BlockSpec((tm, tk), lambda i, j, k: (i, k)),   # graph tile
        pl.BlockSpec((tk, tn), lambda i, j, k: (k, j)),   # emb tile
        pl.BlockSpec((tm, tn), lambda i, j, k: (i, j)),   # running-sum tile
    ]
    out_spec = pl.BlockSpec((tm, tn), lambda i, j, k: (i, j))
    compiler_params = pltpu.CompilerParams(
        dimension_semantics=("parallel", "parallel", "arbitrary"),
        vmem_limit_bytes=32 * 1024 * 1024,
    )

    if is_last:
        kernel = functools.partial(_gcn_final_kernel, inv_scale=float(inv_scale))
        new_sum = pl.pallas_call(
            kernel,
            out_shape=jax.ShapeDtypeStruct((n_pad, e_pad), emb.dtype),
            grid_spec=pltpu.PrefetchScalarGridSpec(
                num_scalar_prefetch=0,
                grid=grid,
                in_specs=in_specs,
                out_specs=out_spec,
                scratch_shapes=[pltpu.VMEM((tm, tn), jnp.float32)],
            ),
            compiler_params=compiler_params,
            cost_estimate=cost,
        )(graph, emb, run_sum)
        return None, new_sum

    new_emb, new_sum = pl.pallas_call(
        _gcn_layer_kernel,
        out_shape=(
            jax.ShapeDtypeStruct((n_pad, e_pad), emb.dtype),
            jax.ShapeDtypeStruct((n_pad, e_pad), emb.dtype),
        ),
        grid_spec=pltpu.PrefetchScalarGridSpec(
            num_scalar_prefetch=0,
            grid=grid,
            in_specs=in_specs,
            out_specs=(out_spec, out_spec),
            scratch_shapes=[pltpu.VMEM((tm, tn), jnp.float32)],
        ),
        compiler_params=compiler_params,
        cost_estimate=cost,
    )(graph, emb, run_sum)
    return new_emb, new_sum


def _pick_tiles(n, emb_dim, max_row_tile=512, max_e_tile=512):
    """Tile sizes: 256-multiples for the MXU on rows/reduction, full padded E."""
    # Row / reduction tile (same value used for both tm and tk).
    n_pad_min = _round_up(n, 256)
    tile_r = n_pad_min if n_pad_min <= max_row_tile else max_row_tile
    n_pad = _round_up(n, tile_r)
    # Embedding-column tile: cover all of padded E if it fits, else the largest
    # 128-multiple divisor <= max_e_tile.
    e_pad = _round_up(emb_dim, 128)
    if e_pad <= max_e_tile:
        tile_e = e_pad
    else:
        tile_e = max(t for t in range(128, max_e_tile + 1, 128) if e_pad % t == 0)
    return tile_r, tile_e, n_pad, e_pad


@functools.partial(jax.jit, static_argnames=("layers",))
def lightgcn_forward(groups_emb, items_emb, graph, layers):
    """LightGCN.compute(): returns updated group embeddings (num_groups, E)."""
    num_groups, emb_dim = groups_emb.shape
    num_items = items_emb.shape[0]
    n = num_groups + num_items
    all_emb = jnp.concatenate([groups_emb, items_emb], axis=0).astype(jnp.float32)

    if layers == 0:
        return all_emb[:num_groups]  # mean of a single layer is the input itself

    tile_r, tile_e, n_pad, e_pad = _pick_tiles(n, emb_dim)

    # Zero-pad to tile multiples (zeros contribute nothing to the propagation).
    graph_p = jnp.pad(graph.astype(jnp.float32),
                      ((0, n_pad - n), (0, n_pad - n)))
    emb_p = jnp.pad(all_emb, ((0, n_pad - n), (0, e_pad - emb_dim)))

    cur = emb_p
    run_sum = emb_p  # layer-0 embedding is part of the mean
    inv_final = 1.0 / float(layers + 1)
    for layer in range(layers):
        is_last = layer == layers - 1
        cur, run_sum = _gcn_layer(
            graph_p, cur, run_sum,
            is_last=is_last, inv_scale=inv_final,
            tm=tile_r, tn=tile_e, tk=tile_r,
        )

    # run_sum now holds the mean over the (layers + 1) propagation depths.
    return run_sum[:num_groups, :emb_dim]


def _reference(groups_emb, items_emb, graph, layers, num_groups):
    all_emb = jnp.concatenate([groups_emb, items_emb], axis=0)
    embs = [all_emb]
    cur = all_emb
    for _ in range(layers):
        cur = graph @ cur
        embs.append(cur)
    mean = jnp.mean(jnp.stack(embs, axis=1), axis=1)
    return mean[:num_groups]


def _build_norm_bipartite_graph(key, num_groups, num_items):
    """Dense D^-1/2 A D^-1/2 for a random group-item bipartite interaction graph."""
    r = (jax.random.uniform(key, (num_groups, num_items)) < 0.4).astype(jnp.float32)
    n = num_groups + num_items
    a = jnp.zeros((n, n), jnp.float32)
    a = a.at[:num_groups, num_groups:].set(r)
    a = a.at[num_groups:, :num_groups].set(r.T)
    deg = a.sum(axis=1)
    d_inv_sqrt = jnp.where(deg > 0, 1.0 / jnp.sqrt(deg), 0.0)
    return d_inv_sqrt[:, None] * a * d_inv_sqrt[None, :]


if __name__ == "__main__":
    key = jax.random.PRNGKey(0)
    kg, ki, ka = jax.random.split(key, 3)

    num_groups, num_items, emb_dim, layers = 8, 8, 32, 3
    groups_emb = jax.random.normal(kg, (num_groups, emb_dim), jnp.float32)
    items_emb = jax.random.normal(ki, (num_items, emb_dim), jnp.float32)
    graph = _build_norm_bipartite_graph(ka, num_groups, num_items)

    out = lightgcn_forward(groups_emb, items_emb, graph, layers)
    out = jax.block_until_ready(out)

    ref = _reference(groups_emb, items_emb, graph, layers, num_groups)
    assert out.shape == (num_groups, emb_dim), out.shape
    assert jnp.allclose(out, ref, atol=1e-4, rtol=1e-4), float(
        jnp.max(jnp.abs(out - ref))
    )

    print("KERNEL_OK")
</pallas_src>

<mosaic_0001>
module attributes {stable_mosaic.version = 11 : i64} {
  func.func @_gcn_final_kernel(%arg0: i32, %arg1: i32, %arg2: i32, %arg3: memref<256x256xf32, #tpu.memory_space<vmem>>, %arg4: memref<256x128xf32, #tpu.memory_space<vmem>>, %arg5: memref<256x128xf32, #tpu.memory_space<vmem>>, %arg6: memref<256x128xf32, #tpu.memory_space<vmem>>, %arg7: memref<256x128xf32, #tpu.memory_space<vmem>>) attributes {dimension_semantics = [#tpu.dimension_semantics<parallel>, #tpu.dimension_semantics<parallel>, #tpu.dimension_semantics<arbitrary>], iteration_bounds = array<i64: 1, 1, 1>, scalar_prefetch = 0 : i64, scratch_operands = 1 : i64, tpu.core_type = #tpu.core_type<tc>, window_params = [{transform_indices = @transform_0, window_bounds = array<i64: 256, 256>}, {transform_indices = @transform_1, window_bounds = array<i64: 256, 128>}, {transform_indices = @transform_2, window_bounds = array<i64: 256, 128>}, {transform_indices = @transform_3, window_bounds = array<i64: 256, 128>}]} {
    %c0_i32 = arith.constant 0 : i32
    %0 = arith.cmpi eq, %arg2, %c0_i32 : i32
    %1 = arith.extui %0 : i1 to i32
    %c0_i32_0 = arith.constant 0 : i32
    %2 = arith.cmpi ne, %1, %c0_i32_0 : i32
    scf.if %2 {
      %cst_10 = arith.constant 0.000000e+00 : f32
      %12 = vector.broadcast %cst_10 : f32 to vector<256x128xf32>
      %c0_11 = arith.constant 0 : index
      %c0_12 = arith.constant 0 : index
      %13 = vector.load %arg7[%c0_11, %c0_12] : memref<256x128xf32, #tpu.memory_space<vmem>>, vector<256x128xf32>
      tpu.vector_store %arg7[%c0_11, %c0_12], %12 {strides = array<i32>} : memref<256x128xf32, #tpu.memory_space<vmem>>, vector<256x128xf32>,
    } else {
    }
    %c0 = arith.constant 0 : index
    %c0_1 = arith.constant 0 : index
    %3 = vector.load %arg7[%c0, %c0_1] : memref<256x128xf32, #tpu.memory_space<vmem>>, vector<256x128xf32>
    %c0_2 = arith.constant 0 : index
    %c0_3 = arith.constant 0 : index
    %4 = vector.load %arg3[%c0_2, %c0_3] : memref<256x256xf32, #tpu.memory_space<vmem>>, vector<256x256xf32>
    %c0_4 = arith.constant 0 : index
    %c0_5 = arith.constant 0 : index
    %5 = vector.load %arg4[%c0_4, %c0_5] : memref<256x128xf32, #tpu.memory_space<vmem>>, vector<256x128xf32>
    %cst = arith.constant dense<0.000000e+00> : vector<256x128xf32>
    %6 = tpu.matmul %4, %5, %cst {dimension_numbers = #tpu.dot_dimension_numbers<[1], [0], [0], [1], [0, 0, 1, 1], [], []>} : vector<256x256xf32>, vector<256x128xf32>, vector<256x128xf32> -> vector<256x128xf32>
    %7 = arith.addf %3, %6 : vector<256x128xf32>
    %c0_6 = arith.constant 0 : index
    %c0_7 = arith.constant 0 : index
    %8 = vector.load %arg7[%c0_6, %c0_7] : memref<256x128xf32, #tpu.memory_space<vmem>>, vector<256x128xf32>
    tpu.vector_store %arg7[%c0_6, %c0_7], %7 {strides = array<i32>} : memref<256x128xf32, #tpu.memory_space<vmem>>, vector<256x128xf32>,
    %c0_i32_8 = arith.constant 0 : i32
    %9 = arith.cmpi eq, %arg2, %c0_i32_8 : i32
    %10 = arith.extui %9 : i1 to i32
    %c0_i32_9 = arith.constant 0 : i32
    %11 = arith.cmpi ne, %10, %c0_i32_9 : i32
    scf.if %11 {
      %c0_10 = arith.constant 0 : index
      %c0_11 = arith.constant 0 : index
      %12 = vector.load %arg5[%c0_10, %c0_11] : memref<256x128xf32, #tpu.memory_space<vmem>>, vector<256x128xf32>
      %c0_12 = arith.constant 0 : index
      %c0_13 = arith.constant 0 : index
      %13 = vector.load %arg7[%c0_12, %c0_13] : memref<256x128xf32, #tpu.memory_space<vmem>>, vector<256x128xf32>
      %14 = arith.addf %12, %13 : vector<256x128xf32>
      %cst_14 = arith.constant 2.500000e-01 : f32
      %15 = vector.broadcast %cst_14 : f32 to vector<256x128xf32>
      %16 = arith.mulf %14, %15 : vector<256x128xf32>
      %c0_15 = arith.constant 0 : index
      %c0_16 = arith.constant 0 : index
      %17 = vector.load %arg6[%c0_15, %c0_16] : memref<256x128xf32, #tpu.memory_space<vmem>>, vector<256x128xf32>
      tpu.vector_store %arg6[%c0_15, %c0_16], %16 {strides = array<i32>} : memref<256x128xf32, #tpu.memory_space<vmem>>, vector<256x128xf32>,
    } else {
    }
    return
  }
  func.func @transform_0(%arg0: i32, %arg1: i32, %arg2: i32) -> (i32, i32) {
    %c0_i32 = arith.constant 0 : i32
    return %arg0, %arg2 : i32, i32
  }
  func.func @transform_1(%arg0: i32, %arg1: i32, %arg2: i32) -> (i32, i32) {
    %c0_i32 = arith.constant 0 : i32
    return %arg2, %arg1 : i32, i32
  }
  func.func @transform_2(%arg0: i32, %arg1: i32, %arg2: i32) -> (i32, i32) {
    %c0_i32 = arith.constant 0 : i32
    return %arg0, %arg1 : i32, i32
  }
  func.func @transform_3(%arg0: i32, %arg1: i32, %arg2: i32) -> (i32, i32) {
    %c0_i32 = arith.constant 0 : i32
    return %arg0, %arg1 : i32, i32
  }
}

module attributes {stable_mosaic.version = 11 : i64} {
  func.func @_gcn_layer_kernel(%arg0: i32, %arg1: i32, %arg2: i32, %arg3: memref<256x256xf32, #tpu.memory_space<vmem>>, %arg4: memref<256x128xf32, #tpu.memory_space<vmem>>, %arg5: memref<256x128xf32, #tpu.memory_space<vmem>>, %arg6: memref<256x128xf32, #tpu.memory_space<vmem>>, %arg7: memref<256x128xf32, #tpu.memory_space<vmem>>, %arg8: memref<256x128xf32, #tpu.memory_space<vmem>>) attributes {dimension_semantics = [#tpu.dimension_semantics<parallel>, #tpu.dimension_semantics<parallel>, #tpu.dimension_semantics<arbitrary>], iteration_bounds = array<i64: 1, 1, 1>, scalar_prefetch = 0 : i64, scratch_operands = 1 : i64, tpu.core_type = #tpu.core_type<tc>, window_params = [{transform_indices = @transform_0, window_bounds = array<i64: 256, 256>}, {transform_indices = @transform_1, window_bounds = array<i64: 256, 128>}, {transform_indices = @transform_2, window_bounds = array<i64: 256, 128>}, {transform_indices = @transform_3, window_bounds = array<i64: 256, 128>}, {transform_indices = @transform_4, window_bounds = array<i64: 256, 128>}]} {
    %c0_i32 = arith.constant 0 : i32
    %0 = arith.cmpi eq, %arg2, %c0_i32 : i32
    %1 = arith.extui %0 : i1 to i32
    %c0_i32_0 = arith.constant 0 : i32
    %2 = arith.cmpi ne, %1, %c0_i32_0 : i32
    scf.if %2 {
      %cst_10 = arith.constant 0.000000e+00 : f32
      %12 = vector.broadcast %cst_10 : f32 to vector<256x128xf32>
      %c0_11 = arith.constant 0 : index
      %c0_12 = arith.constant 0 : index
      %13 = vector.load %arg8[%c0_11, %c0_12] : memref<256x128xf32, #tpu.memory_space<vmem>>, vector<256x128xf32>
      tpu.vector_store %arg8[%c0_11, %c0_12], %12 {strides = array<i32>} : memref<256x128xf32, #tpu.memory_space<vmem>>, vector<256x128xf32>,
    } else {
    }
    %c0 = arith.constant 0 : index
    %c0_1 = arith.constant 0 : index
    %3 = vector.load %arg8[%c0, %c0_1] : memref<256x128xf32, #tpu.memory_space<vmem>>, vector<256x128xf32>
    %c0_2 = arith.constant 0 : index
    %c0_3 = arith.constant 0 : index
    %4 = vector.load %arg3[%c0_2, %c0_3] : memref<256x256xf32, #tpu.memory_space<vmem>>, vector<256x256xf32>
    %c0_4 = arith.constant 0 : index
    %c0_5 = arith.constant 0 : index
    %5 = vector.load %arg4[%c0_4, %c0_5] : memref<256x128xf32, #tpu.memory_space<vmem>>, vector<256x128xf32>
    %cst = arith.constant dense<0.000000e+00> : vector<256x128xf32>
    %6 = tpu.matmul %4, %5, %cst {dimension_numbers = #tpu.dot_dimension_numbers<[1], [0], [0], [1], [0, 0, 1, 1], [], []>} : vector<256x256xf32>, vector<256x128xf32>, vector<256x128xf32> -> vector<256x128xf32>
    %7 = arith.addf %3, %6 : vector<256x128xf32>
    %c0_6 = arith.constant 0 : index
    %c0_7 = arith.constant 0 : index
    %8 = vector.load %arg8[%c0_6, %c0_7] : memref<256x128xf32, #tpu.memory_space<vmem>>, vector<256x128xf32>
    tpu.vector_store %arg8[%c0_6, %c0_7], %7 {strides = array<i32>} : memref<256x128xf32, #tpu.memory_space<vmem>>, vector<256x128xf32>,
    %c0_i32_8 = arith.constant 0 : i32
    %9 = arith.cmpi eq, %arg2, %c0_i32_8 : i32
    %10 = arith.extui %9 : i1 to i32
    %c0_i32_9 = arith.constant 0 : i32
    %11 = arith.cmpi ne, %10, %c0_i32_9 : i32
    scf.if %11 {
      %c0_10 = arith.constant 0 : index
      %c0_11 = arith.constant 0 : index
      %12 = vector.load %arg8[%c0_10, %c0_11] : memref<256x128xf32, #tpu.memory_space<vmem>>, vector<256x128xf32>
      %c0_12 = arith.constant 0 : index
      %c0_13 = arith.constant 0 : index
      %13 = vector.load %arg6[%c0_12, %c0_13] : memref<256x128xf32, #tpu.memory_space<vmem>>, vector<256x128xf32>
      tpu.vector_store %arg6[%c0_12, %c0_13], %12 {strides = array<i32>} : memref<256x128xf32, #tpu.memory_space<vmem>>, vector<256x128xf32>,
      %c0_14 = arith.constant 0 : index
      %c0_15 = arith.constant 0 : index
      %14 = vector.load %arg5[%c0_14, %c0_15] : memref<256x128xf32, #tpu.memory_space<vmem>>, vector<256x128xf32>
      %15 = arith.addf %14, %12 : vector<256x128xf32>
      %c0_16 = arith.constant 0 : index
      %c0_17 = arith.constant 0 : index
      %16 = vector.load %arg7[%c0_16, %c0_17] : memref<256x128xf32, #tpu.memory_space<vmem>>, vector<256x128xf32>
      tpu.vector_store %arg7[%c0_16, %c0_17], %15 {strides = array<i32>} : memref<256x128xf32, #tpu.memory_space<vmem>>, vector<256x128xf32>,
    } else {
    }
    return
  }
  func.func @transform_0(%arg0: i32, %arg1: i32, %arg2: i32) -> (i32, i32) {
    %c0_i32 = arith.constant 0 : i32
    return %arg0, %arg2 : i32, i32
  }
  func.func @transform_1(%arg0: i32, %arg1: i32, %arg2: i32) -> (i32, i32) {
    %c0_i32 = arith.constant 0 : i32
    return %arg2, %arg1 : i32, i32
  }
  func.func @transform_2(%arg0: i32, %arg1: i32, %arg2: i32) -> (i32, i32) {
    %c0_i32 = arith.constant 0 : i32
    return %arg0, %arg1 : i32, i32
  }
  func.func @transform_3(%arg0: i32, %arg1: i32, %arg2: i32) -> (i32, i32) {
    %c0_i32 = arith.constant 0 : i32
    return %arg0, %arg1 : i32, i32
  }
  func.func @transform_4(%arg0: i32, %arg1: i32, %arg2: i32) -> (i32, i32) {
    %c0_i32 = arith.constant 0 : i32
    return %arg0, %arg1 : i32, i32
  }
}

</mosaic_0001>

<llo_original>
// kernel: lightgcn_forward.5
$region0: #{lightgcn_forward.5}
  #allocation0 [shape = 'u32[]', space=smem, size = 0x4, offset = 0x4, fixed_abs, tag = 'smem constant byte address 0x4 - core index']
  #allocation1 [shape = 'u32[144,128]{1,0:T(1,128)}', space=vmem, size = 0x12000, scoped, tag = 'internal scratch']
  #allocation2 [shape = 'f32[256,128]{1,0:T(8,128)}', space=vmem, size = 0x20000, scoped, tag = 'scratch operand']
  %s0 = inlined_call_operand.vmem [shape: f32[256,256], index: 0, kind: input, shape index: {}]
  %s1 = inlined_call_operand.vmem [shape: f32[256,128], index: 1, kind: input, shape index: {}]
  %s2 = inlined_call_operand.vmem [shape: f32[256,128], index: 2, kind: input, shape index: {}]
  %s3 = inlined_call_operand.vmem [shape: f32[256,128], index: 3, kind: output, shape index: {}]
  %s4 = sld [smem:[#allocation0]]
  $region30: #{lightgcn_forward.5} parent=0
    _
  %s6 = ssub.s32 1, %s4
  %s7 = scalar_select 0, %s6, %s4
  // Predicated region
  $region2: #{lightgcn_forward.5} parent=0 // pred_check
    _
  $region3: #{lightgcn_forward.5} parent=0 // pred_check_branch
    %9 = sbr.rel (0) target = $region5
  $region4: #{lightgcn_forward.5} parent=0 // pred_region
    _
  $region5: #{lightgcn_forward.5} parent=0 // pred_fallthru
    _
  // Predicated region
  $region6: #{lightgcn_forward.5} parent=0 // pred_check
    _
  $region7: #{lightgcn_forward.5} parent=0 // pred_check_branch
    %11 = sbr.rel (0) target = $region9
  $region8: #{lightgcn_forward.5} parent=0 // pred_region
    _
  $region9: #{lightgcn_forward.5} parent=0 // pred_fallthru
    _
  // Predicated region
  $region10: #{lightgcn_forward.5} parent=0 // pred_check
    _
  $region11: #{lightgcn_forward.5} parent=0 // pred_check_branch
    %13 = sbr.rel (0) target = $region13
  $region12: #{lightgcn_forward.5} parent=0 // pred_region
    _
  $region13: #{lightgcn_forward.5} parent=0 // pred_fallthru
    _
  %p14 = scmp.eq.s32.totalorder 0, 0
  // Predicated region
  $region14: #{lightgcn_forward.5} parent=0 // pred_check
    %p15 = pneg %p14
  $region15: #{lightgcn_forward.5} parent=0 // pred_check_branch
    %17 = sbr.rel (%p15) target = $region17
  $region16: #{lightgcn_forward.5} parent=0 // pred_region
    %18 = vst [vmem:[#allocation2] sm:$0xff] 0.0
    %19 = vst [vmem:[#allocation2 + $0x8] sm:$0xff] 0.0
    %20 = vst [vmem:[#allocation2 + $0x10] sm:$0xff] 0.0
    %21 = vst [vmem:[#allocation2 + $0x18] sm:$0xff] 0.0
    %22 = vst [vmem:[#allocation2 + $0x20] sm:$0xff] 0.0
    %23 = vst [vmem:[#allocation2 + $0x28] sm:$0xff] 0.0
    %24 = vst [vmem:[#allocation2 + $0x30] sm:$0xff] 0.0
    %25 = vst [vmem:[#allocation2 + $0x38] sm:$0xff] 0.0
    %26 = vst [vmem:[#allocation2 + $0x40] sm:$0xff] 0.0
    %27 = vst [vmem:[#allocation2 + $0x48] sm:$0xff] 0.0
    %28 = vst [vmem:[#allocation2 + $0x50] sm:$0xff] 0.0
    %29 = vst [vmem:[#allocation2 + $0x58] sm:$0xff] 0.0
    %30 = vst [vmem:[#allocation2 + $0x60] sm:$0xff] 0.0
    %31 = vst [vmem:[#allocation2 + $0x68] sm:$0xff] 0.0
    %32 = vst [vmem:[#allocation2 + $0x70] sm:$0xff] 0.0
    %33 = vst [vmem:[#allocation2 + $0x78] sm:$0xff] 0.0
    %34 = vst [vmem:[#allocation2 + $0x80] sm:$0xff] 0.0
    %35 = vst [vmem:[#allocation2 + $0x88] sm:$0xff] 0.0
    %36 = vst [vmem:[#allocation2 + $0x90] sm:$0xff] 0.0
    %37 = vst [vmem:[#allocation2 + $0x98] sm:$0xff] 0.0
    %38 = vst [vmem:[#allocation2 + $0xa0] sm:$0xff] 0.0
    %39 = vst [vmem:[#allocation2 + $0xa8] sm:$0xff] 0.0
    %40 = vst [vmem:[#allocation2 + $0xb0] sm:$0xff] 0.0
    %41 = vst [vmem:[#allocation2 + $0xb8] sm:$0xff] 0.0
    %42 = vst [vmem:[#allocation2 + $0xc0] sm:$0xff] 0.0
    %43 = vst [vmem:[#allocation2 + $0xc8] sm:$0xff] 0.0
    %44 = vst [vmem:[#allocation2 + $0xd0] sm:$0xff] 0.0
    %45 = vst [vmem:[#allocation2 + $0xd8] sm:$0xff] 0.0
    %46 = vst [vmem:[#allocation2 + $0xe0] sm:$0xff] 0.0
    %47 = vst [vmem:[#allocation2 + $0xe8] sm:$0xff] 0.0
    %48 = vst [vmem:[#allocation2 + $0xf0] sm:$0xff] 0.0
    %49 = vst [vmem:[#allocation2 + $0xf8] sm:$0xff] 0.0
  $region17: #{lightgcn_forward.5} parent=0 // pred_fallthru
    _
  %v50 = vld [vmem:[#allocation2] sm:$0xff]
  %v51 = vld [vmem:[#allocation2 + $0x8] sm:$0xff]
  %v52 = vld [vmem:[#allocation2 + $0x10] sm:$0xff]
  %v53 = vld [vmem:[#allocation2 + $0x18] sm:$0xff]
  %v54 = vld [vmem:[#allocation2 + $0x20] sm:$0xff]
  %v55 = vld [vmem:[#allocation2 + $0x28] sm:$0xff]
  %v56 = vld [vmem:[#allocation2 + $0x30] sm:$0xff]
  %v57 = vld [vmem:[#allocation2 + $0x38] sm:$0xff]
  %v58 = vld [vmem:[#allocation2 + $0x40] sm:$0xff]
  %v59 = vld [vmem:[#allocation2 + $0x48] sm:$0xff]
  %v60 = vld [vmem:[#allocation2 + $0x50] sm:$0xff]
  %v61 = vld [vmem:[#allocation2 + $0x58] sm:$0xff]
  %v62 = vld [vmem:[#allocation2 + $0x60] sm:$0xff]
  %v63 = vld [vmem:[#allocation2 + $0x68] sm:$0xff]
  %v64 = vld [vmem:[#allocation2 + $0x70] sm:$0xff]
  %v65 = vld [vmem:[#allocation2 + $0x78] sm:$0xff]
  %v66 = vld [vmem:[#allocation2 + $0x80] sm:$0xff]
  %v67 = vld [vmem:[#allocation2 + $0x88] sm:$0xff]
  %v68 = vld [vmem:[#allocation2 + $0x90] sm:$0xff]
  %v69 = vld [vmem:[#allocation2 + $0x98] sm:$0xff]
  %v70 = vld [vmem:[#allocation2 + $0xa0] sm:$0xff]
  %v71 = vld [vmem:[#allocation2 + $0xa8] sm:$0xff]
  %v72 = vld [vmem:[#allocation2 + $0xb0] sm:$0xff]
  %v73 = vld [vmem:[#allocation2 + $0xb8] sm:$0xff]
  %v74 = vld [vmem:[#allocation2 + $0xc0] sm:$0xff]
  %v75 = vld [vmem:[#allocation2 + $0xc8] sm:$0xff]
  %v76 = vld [vmem:[#allocation2 + $0xd0] sm:$0xff]
  %v77 = vld [vmem:[#allocation2 + $0xd8] sm:$0xff]
  %v78 = vld [vmem:[#allocation2 + $0xe0] sm:$0xff]
  %v79 = vld [vmem:[#allocation2 + $0xe8] sm:$0xff]
  %v80 = vld [vmem:[#allocation2 + $0xf0] sm:$0xff]
  %v81 = vld [vmem:[#allocation2 + $0xf8] sm:$0xff]
  %v82 = vld [vmem:[%s0] sm:$0xff]
  %v83 = vld [vmem:[%s0 + $0x8] sm:$0xff]
  %v84 = vld [vmem:[%s0 + $0x10] sm:$0xff]
  %v85 = vld [vmem:[%s0 + $0x18] sm:$0xff]
  %v86 = vld [vmem:[%s0 + $0x20] sm:$0xff]
  %v87 = vld [vmem:[%s0 + $0x28] sm:$0xff]
  %v88 = vld [vmem:[%s0 + $0x30] sm:$0xff]
  %v89 = vld [vmem:[%s0 + $0x38] sm:$0xff]
  %v90 = vld [vmem:[%s0 + $0x40] sm:$0xff]
  %v91 = vld [vmem:[%s0 + $0x48] sm:$0xff]
  %v92 = vld [vmem:[%s0 + $0x50] sm:$0xff]
  %v93 = vld [vmem:[%s0 + $0x58] sm:$0xff]
  %v94 = vld [vmem:[%s0 + $0x60] sm:$0xff]
  %v95 = vld [vmem:[%s0 + $0x68] sm:$0xff]
  %v96 = vld [vmem:[%s0 + $0x70] sm:$0xff]
  %v97 = vld [vmem:[%s0 + $0x78] sm:$0xff]
  %v98 = vld [vmem:[%s0 + $0x80] sm:$0xff]
  %v99 = vld [vmem:[%s0 + $0x88] sm:$0xff]
  %v100 = vld [vmem:[%s0 + $0x90] sm:$0xff]
  %v101 = vld [vmem:[%s0 + $0x98] sm:$0xff]
  %v102 = vld [vmem:[%s0 + $0xa0] sm:$0xff]
  %v103 = vld [vmem:[%s0 + $0xa8] sm:$0xff]
  %v104 = vld [vmem:[%s0 + $0xb0] sm:$0xff]
  %v105 = vld [vmem:[%s0 + $0xb8] sm:$0xff]
  %v106 = vld [vmem:[%s0 + $0xc0] sm:$0xff]
  %v107 = vld [vmem:[%s0 + $0xc8] sm:$0xff]
  %v108 = vld [vmem:[%s0 + $0xd0] sm:$0xff]
  %v109 = vld [vmem:[%s0 + $0xd8] sm:$0xff]
  %v110 = vld [vmem:[%s0 + $0xe0] sm:$0xff]
  %v111 = vld [vmem:[%s0 + $0xe8] sm:$0xff]
  %v112 = vld [vmem:[%s0 + $0xf0] sm:$0xff]
  %v113 = vld [vmem:[%s0 + $0xf8] sm:$0xff]
  %v114 = vld [vmem:[%s0 + $0x100] sm:$0xff]
  %v115 = vld [vmem:[%s0 + $0x108] sm:$0xff]
  %v116 = vld [vmem:[%s0 + $0x110] sm:$0xff]
  %v117 = vld [vmem:[%s0 + $0x118] sm:$0xff]
  %v118 = vld [vmem:[%s0 + $0x120] sm:$0xff]
  %v119 = vld [vmem:[%s0 + $0x128] sm:$0xff]
  %v120 = vld [vmem:[%s0 + $0x130] sm:$0xff]
  %v121 = vld [vmem:[%s0 + $0x138] sm:$0xff]
  %v122 = vld [vmem:[%s0 + $0x140] sm:$0xff]
  %v123 = vld [vmem:[%s0 + $0x148] sm:$0xff]
  %v124 = vld [vmem:[%s0 + $0x150] sm:$0xff]
  %v125 = vld [vmem:[%s0 + $0x158] sm:$0xff]
  %v126 = vld [vmem:[%s0 + $0x160] sm:$0xff]
  %v127 = vld [vmem:[%s0 + $0x168] sm:$0xff]
  %v128 = vld [vmem:[%s0 + $0x170] sm:$0xff]
  %v129 = vld [vmem:[%s0 + $0x178] sm:$0xff]
  %v130 = vld [vmem:[%s0 + $0x180] sm:$0xff]
  %v131 = vld [vmem:[%s0 + $0x188] sm:$0xff]
  %v132 = vld [vmem:[%s0 + $0x190] sm:$0xff]
  %v133 = vld [vmem:[%s0 + $0x198] sm:$0xff]
  %v134 = vld [vmem:[%s0 + $0x1a0] sm:$0xff]
  %v135 = vld [vmem:[%s0 + $0x1a8] sm:$0xff]
  %v136 = vld [vmem:[%s0 + $0x1b0] sm:$0xff]
  %v137 = vld [vmem:[%s0 + $0x1b8] sm:$0xff]
  %v138 = vld [vmem:[%s0 + $0x1c0] sm:$0xff]
  %v139 = vld [vmem:[%s0 + $0x1c8] sm:$0xff]
  %v140 = vld [vmem:[%s0 + $0x1d0] sm:$0xff]
  %v141 = vld [vmem:[%s0 + $0x1d8] sm:$0xff]
  %v142 = vld [vmem:[%s0 + $0x1e0] sm:$0xff]
  %v143 = vld [vmem:[%s0 + $0x1e8] sm:$0xff]
  %v144 = vld [vmem:[%s0 + $0x1f0] sm:$0xff]
  %v145 = vld [vmem:[%s0 + $0x1f8] sm:$0xff]
  %v146 = vld [vmem:[%s1] sm:$0xff]
  %v147 = vld [vmem:[%s1 + $0x8] sm:$0xff]
  %v148 = vld [vmem:[%s1 + $0x10] sm:$0xff]
  %v149 = vld [vmem:[%s1 + $0x18] sm:$0xff]
  %v150 = vld [vmem:[%s1 + $0x20] sm:$0xff]
  %v151 = vld [vmem:[%s1 + $0x28] sm:$0xff]
  %v152 = vld [vmem:[%s1 + $0x30] sm:$0xff]
  %v153 = vld [vmem:[%s1 + $0x38] sm:$0xff]
  %v154 = vld [vmem:[%s1 + $0x40] sm:$0xff]
  %v155 = vld [vmem:[%s1 + $0x48] sm:$0xff]
  %v156 = vld [vmem:[%s1 + $0x50] sm:$0xff]
  %v157 = vld [vmem:[%s1 + $0x58] sm:$0xff]
  %v158 = vld [vmem:[%s1 + $0x60] sm:$0xff]
  %v159 = vld [vmem:[%s1 + $0x68] sm:$0xff]
  %v160 = vld [vmem:[%s1 + $0x70] sm:$0xff]
  %v161 = vld [vmem:[%s1 + $0x78] sm:$0xff]
  %v162 = vld [vmem:[%s1 + $0x80] sm:$0xff]
  %v163 = vld [vmem:[%s1 + $0x88] sm:$0xff]
  %v164 = vld [vmem:[%s1 + $0x90] sm:$0xff]
  %v165 = vld [vmem:[%s1 + $0x98] sm:$0xff]
  %v166 = vld [vmem:[%s1 + $0xa0] sm:$0xff]
  %v167 = vld [vmem:[%s1 + $0xa8] sm:$0xff]
  %v168 = vld [vmem:[%s1 + $0xb0] sm:$0xff]
  %v169 = vld [vmem:[%s1 + $0xb8] sm:$0xff]
  %v170 = vld [vmem:[%s1 + $0xc0] sm:$0xff]
  %v171 = vld [vmem:[%s1 + $0xc8] sm:$0xff]
  %v172 = vld [vmem:[%s1 + $0xd0] sm:$0xff]
  %v173 = vld [vmem:[%s1 + $0xd8] sm:$0xff]
  %v174 = vld [vmem:[%s1 + $0xe0] sm:$0xff]
  %v175 = vld [vmem:[%s1 + $0xe8] sm:$0xff]
  %v176 = vld [vmem:[%s1 + $0xf0] sm:$0xff]
  %v177 = vld [vmem:[%s1 + $0xf8] sm:$0xff]
  %178 = vmatprep.subr.mxu0 0.0
  %179 = vmatpush1.msra.mxu0 %v161
  %180 = vmatprep.subr.mxu0 0.0
  %181 = vmatpush1.msra.mxu0 %v160
  %182 = vmatprep.subr.mxu0 0.0
  %183 = vmatpush1.msra.mxu0 %v159
  %184 = vmatprep.subr.mxu0 0.0
  %185 = vmatpush1.msra.mxu0 %v158
  %186 = vmatprep.subr.mxu0 0.0
  %187 = vmatpush1.msra.mxu0 %v157
  %188 = vmatprep.subr.mxu0 0.0
  %189 = vmatpush1.msra.mxu0 %v156
  %190 = vmatprep.subr.mxu0 0.0
  %191 = vmatpush1.msra.mxu0 %v155
  %192 = vmatprep.subr.mxu0 0.0
  %193 = vmatpush1.msra.mxu0 %v154
  %194 = vmatprep.subr.mxu0 0.0
  %195 = vmatpush1.msra.mxu0 %v153
  %196 = vmatprep.subr.mxu0 0.0
  %197 = vmatpush1.msra.mxu0 %v152
  %198 = vmatprep.subr.mxu0 0.0
  %199 = vmatpush1.msra.mxu0 %v151
  %200 = vmatprep.subr.mxu0 0.0
  %201 = vmatpush1.msra.mxu0 %v150
  %202 = vmatprep.subr.mxu0 0.0
  %203 = vmatpush1.msra.mxu0 %v149
  %204 = vmatprep.subr.mxu0 0.0
  %205 = vmatpush1.msra.mxu0 %v148
  %206 = vmatprep.subr.mxu0 0.0
  %207 = vmatpush1.msra.mxu0 %v147
  %208 = vmatprep.subr.mxu0 0.0
  %209 = vmatpush1.msra.mxu0 %v146
  %210 = vmatprep.subr.mxu0 0.0
  %211 = vmatpush2.msra.mxu0 %v177
  %212 = vmatprep.subr.mxu0 0.0
  %213 = vmatpush2.msra.mxu0 %v176
  %214 = vmatprep.subr.mxu0 0.0
  %215 = vmatpush2.msra.mxu0 %v175
  %216 = vmatprep.subr.mxu0 0.0
  %217 = vmatpush2.msra.mxu0 %v174
  %218 = vmatprep.subr.mxu0 0.0
  %219 = vmatpush2.msra.mxu0 %v173
  %220 = vmatprep.subr.mxu0 0.0
  %221 = vmatpush2.msra.mxu0 %v172
  %222 = vmatprep.subr.mxu0 0.0
  %223 = vmatpush2.msra.mxu0 %v171
  %224 = vmatprep.subr.mxu0 0.0
  %225 = vmatpush2.msra.mxu0 %v170
  %226 = vmatprep.subr.mxu0 0.0
  %227 = vmatpush2.msra.mxu0 %v169
  %228 = vmatprep.subr.mxu0 0.0
  %229 = vmatpush2.msra.mxu0 %v168
  %230 = vmatprep.subr.mxu0 0.0
  %231 = vmatpush2.msra.mxu0 %v167
  %232 = vmatprep.subr.mxu0 0.0
  %233 = vmatpush2.msra.mxu0 %v166
  %234 = vmatprep.subr.mxu0 0.0
  %235 = vmatpush2.msra.mxu0 %v165
  %236 = vmatprep.subr.mxu0 0.0
  %237 = vmatpush2.msra.mxu0 %v164
  %238 = vmatprep.subr.mxu0 0.0
  %239 = vmatpush2.msra.mxu0 %v163
  %240 = vmatprep.subr.mxu0 0.0
  %241 = vmatpush2.msra.mxu0 %v162
  %242 = vmatprep.mubr.f32.mxu0 %v83
  %243 = vmatmul.mubr.f32.gmra.mxu0 %v82
  %v244 = vpop.f32.mrf.mxu0
  %v245 = vadd.f32 0.0, %v244
  %v246 = vpop.f32.mrf.mxu0
  %247 = vmatprep.mubr.f32.mxu0 %v85
  %248 = vmatmul.mubr.f32.gmra.mxu0 %v84
  %v249 = vpop.f32.mrf.mxu0
  %v250 = vadd.f32 0.0, %v249
  %v251 = vpop.f32.mrf.mxu0
  %252 = vmatprep.mubr.f32.mxu0 %v87
  %253 = vmatmul.mubr.f32.gmra.mxu0 %v86
  %v254 = vpop.f32.mrf.mxu0
  %v255 = vadd.f32 0.0, %v254
  %v256 = vpop.f32.mrf.mxu0
  %257 = vmatprep.mubr.f32.mxu0 %v89
  %258 = vmatmul.mubr.f32.gmra.mxu0 %v88
  %v259 = vpop.f32.mrf.mxu0
  %v260 = vadd.f32 0.0, %v259
  %v261 = vpop.f32.mrf.mxu0
  %262 = vmatprep.mubr.f32.mxu0 %v91
  %263 = vmatmul.mubr.f32.gmra.mxu0 %v90
  %v264 = vpop.f32.mrf.mxu0
  %v265 = vadd.f32 0.0, %v264
  %v266 = vpop.f32.mrf.mxu0
  %267 = vmatprep.mubr.f32.mxu0 %v93
  %268 = vmatmul.mubr.f32.gmra.mxu0 %v92
  %v269 = vpop.f32.mrf.mxu0
  %v270 = vadd.f32 0.0, %v269
  %v271 = vpop.f32.mrf.mxu0
  %272 = vmatprep.mubr.f32.mxu0 %v95
  %273 = vmatmul.mubr.f32.gmra.mxu0 %v94
  %v274 = vpop.f32.mrf.mxu0
  %v275 = vadd.f32 0.0, %v274
  %v276 = vpop.f32.mrf.mxu0
  %277 = vmatprep.mubr.f32.mxu0 %v97
  %278 = vmatmul.mubr.f32.gmra.mxu0 %v96
  %v279 = vpop.f32.mrf.mxu0
  %v280 = vadd.f32 0.0, %v279
  %v281 = vpop.f32.mrf.mxu0
  %282 = vmatprep.mubr.f32.mxu0 %v99
  %283 = vmatmul.mubr.f32.gmra.mxu0 %v98
  %v284 = vpop.f32.mrf.mxu0
  %v285 = vadd.f32 0.0, %v284
  %v286 = vpop.f32.mrf.mxu0
  %287 = vmatprep.mubr.f32.mxu0 %v101
  %288 = vmatmul.mubr.f32.gmra.mxu0 %v100
  %v289 = vpop.f32.mrf.mxu0
  %v290 = vadd.f32 0.0, %v289
  %v291 = vpop.f32.mrf.mxu0
  %292 = vmatprep.mubr.f32.mxu0 %v103
  %293 = vmatmul.mubr.f32.gmra.mxu0 %v102
  %v294 = vpop.f32.mrf.mxu0
  %v295 = vadd.f32 0.0, %v294
  %v296 = vpop.f32.mrf.mxu0
  %297 = vmatprep.mubr.f32.mxu0 %v105
  %298 = vmatmul.mubr.f32.gmra.mxu0 %v104
  %v299 = vpop.f32.mrf.mxu0
  %v300 = vadd.f32 0.0, %v299
  %v301 = vpop.f32.mrf.mxu0
  %302 = vmatprep.mubr.f32.mxu0 %v107
  %303 = vmatmul.mubr.f32.gmra.mxu0 %v106
  %v304 = vpop.f32.mrf.mxu0
  %v305 = vadd.f32 0.0, %v304
  %v306 = vpop.f32.mrf.mxu0
  %307 = vmatprep.mubr.f32.mxu0 %v109
  %308 = vmatmul.mubr.f32.gmra.mxu0 %v108
  %v309 = vpop.f32.mrf.mxu0
  %v310 = vadd.f32 0.0, %v309
  %v311 = vpop.f32.mrf.mxu0
  %312 = vmatprep.mubr.f32.mxu0 %v111
  %313 = vmatmul.mubr.f32.gmra.mxu0 %v110
  %v314 = vpop.f32.mrf.mxu0
  %v315 = vadd.f32 0.0, %v314
  %v316 = vpop.f32.mrf.mxu0
  %317 = vmatprep.mubr.f32.mxu0 %v113
  %318 = vmatmul.mubr.f32.gmra.mxu0 %v112
  %v319 = vpop.f32.mrf.mxu0
  %v320 = vadd.f32 0.0, %v319
  %v321 = vpop.f32.mrf.mxu0
  %322 = vmatprep.mubr.f32.mxu0 %v115
  %323 = vmatmul.mubr.f32.gmra.mxu0 %v114
  %v324 = vpop.f32.mrf.mxu0
  %v325 = vadd.f32 0.0, %v324
  %v326 = vpop.f32.mrf.mxu0
  %327 = vmatprep.mubr.f32.mxu0 %v117
  %328 = vmatmul.mubr.f32.gmra.mxu0 %v116
  %v329 = vpop.f32.mrf.mxu0
  %v330 = vadd.f32 0.0, %v329
  %v331 = vpop.f32.mrf.mxu0
  %332 = vmatprep.mubr.f32.mxu0 %v119
  %333 = vmatmul.mubr.f32.gmra.mxu0 %v118
  %v334 = vpop.f32.mrf.mxu0
  %v335 = vadd.f32 0.0, %v334
  %v336 = vpop.f32.mrf.mxu0
  %337 = vmatprep.mubr.f32.mxu0 %v121
  %338 = vmatmul.mubr.f32.gmra.mxu0 %v120
  %v339 = vpop.f32.mrf.mxu0
  %v340 = vadd.f32 0.0, %v339
  %v341 = vpop.f32.mrf.mxu0
  %342 = vmatprep.mubr.f32.mxu0 %v123
  %343 = vmatmul.mubr.f32.gmra.mxu0 %v122
  %v344 = vpop.f32.mrf.mxu0
  %v345 = vadd.f32 0.0, %v344
  %v346 = vpop.f32.mrf.mxu0
  %347 = vmatprep.mubr.f32.mxu0 %v125
  %348 = vmatmul.mubr.f32.gmra.mxu0 %v124
  %v349 = vpop.f32.mrf.mxu0
  %v350 = vadd.f32 0.0, %v349
  %v351 = vpop.f32.mrf.mxu0
  %352 = vmatprep.mubr.f32.mxu0 %v127
  %353 = vmatmul.mubr.f32.gmra.mxu0 %v126
  %v354 = vpop.f32.mrf.mxu0
  %v355 = vadd.f32 0.0, %v354
  %v356 = vpop.f32.mrf.mxu0
  %357 = vmatprep.mubr.f32.mxu0 %v129
  %358 = vmatmul.mubr.f32.gmra.mxu0 %v128
  %v359 = vpop.f32.mrf.mxu0
  %v360 = vadd.f32 0.0, %v359
  %v361 = vpop.f32.mrf.mxu0
  %362 = vmatprep.mubr.f32.mxu0 %v131
  %363 = vmatmul.mubr.f32.gmra.mxu0 %v130
  %v364 = vpop.f32.mrf.mxu0
  %v365 = vadd.f32 0.0, %v364
  %v366 = vpop.f32.mrf.mxu0
  %367 = vmatprep.mubr.f32.mxu0 %v133
  %368 = vmatmul.mubr.f32.gmra.mxu0 %v132
  %v369 = vpop.f32.mrf.mxu0
  %v370 = vadd.f32 0.0, %v369
  %v371 = vpop.f32.mrf.mxu0
  %372 = vmatprep.mubr.f32.mxu0 %v135
  %373 = vmatmul.mubr.f32.gmra.mxu0 %v134
  %v374 = vpop.f32.mrf.mxu0
  %v375 = vadd.f32 0.0, %v374
  %v376 = vpop.f32.mrf.mxu0
  %377 = vmatprep.mubr.f32.mxu0 %v137
  %378 = vmatmul.mubr.f32.gmra.mxu0 %v136
  %v379 = vpop.f32.mrf.mxu0
  %v380 = vadd.f32 0.0, %v379
  %v381 = vpop.f32.mrf.mxu0
  %382 = vmatprep.mubr.f32.mxu0 %v139
  %383 = vmatmul.mubr.f32.gmra.mxu0 %v138
  %v384 = vpop.f32.mrf.mxu0
  %v385 = vadd.f32 0.0, %v384
  %v386 = vpop.f32.mrf.mxu0
  %387 = vmatprep.mubr.f32.mxu0 %v141
  %388 = vmatmul.mubr.f32.gmra.mxu0 %v140
  %v389 = vpop.f32.mrf.mxu0
  %v390 = vadd.f32 0.0, %v389
  %v391 = vpop.f32.mrf.mxu0
  %392 = vmatprep.mubr.f32.mxu0 %v143
  %393 = vmatmul.mubr.f32.gmra.mxu0 %v142
  %v394 = vpop.f32.mrf.mxu0
  %v395 = vadd.f32 0.0, %v394
  %v396 = vpop.f32.mrf.mxu0
  %397 = vmatprep.mubr.f32.mxu0 %v145
  %398 = vmatmul.mubr.f32.gmra.mxu0 %v144
  %v399 = vpop.f32.mrf.mxu0
  %v400 = vadd.f32 0.0, %v399
  %v401 = vpop.f32.mrf.mxu0
  %402 = vdwg.mxu0
  %v403 = vadd.f32 %v50, %v245
  %v404 = vadd.f32 %v51, %v250
  %v405 = vadd.f32 %v52, %v255
  %v406 = vadd.f32 %v53, %v260
  %v407 = vadd.f32 %v54, %v265
  %v408 = vadd.f32 %v55, %v270
  %v409 = vadd.f32 %v56, %v275
  %v410 = vadd.f32 %v57, %v280
  %v411 = vadd.f32 %v58, %v285
  %v412 = vadd.f32 %v59, %v290
  %v413 = vadd.f32 %v60, %v295
  %v414 = vadd.f32 %v61, %v300
  %v415 = vadd.f32 %v62, %v305
  %v416 = vadd.f32 %v63, %v310
  %v417 = vadd.f32 %v64, %v315
  %v418 = vadd.f32 %v65, %v320
  %v419 = vadd.f32 %v66, %v325
  %v420 = vadd.f32 %v67, %v330
  %v421 = vadd.f32 %v68, %v335
  %v422 = vadd.f32 %v69, %v340
  %v423 = vadd.f32 %v70, %v345
  %v424 = vadd.f32 %v71, %v350
  %v425 = vadd.f32 %v72, %v355
  %v426 = vadd.f32 %v73, %v360
  %v427 = vadd.f32 %v74, %v365
  %v428 = vadd.f32 %v75, %v370
  %v429 = vadd.f32 %v76, %v375
  %v430 = vadd.f32 %v77, %v380
  %v431 = vadd.f32 %v78, %v385
  %v432 = vadd.f32 %v79, %v390
  %v433 = vadd.f32 %v80, %v395
  %v434 = vadd.f32 %v81, %v400
  %435 = vst [vmem:[#allocation2] sm:$0xff] %v403
  %436 = vst [vmem:[#allocation2 + $0x8] sm:$0xff] %v404
  %437 = vst [vmem:[#allocation2 + $0x10] sm:$0xff] %v405
  %438 = vst [vmem:[#allocation2 + $0x18] sm:$0xff] %v406
  %439 = vst [vmem:[#allocation2 + $0x20] sm:$0xff] %v407
  %440 = vst [vmem:[#allocation2 + $0x28] sm:$0xff] %v408
  %441 = vst [vmem:[#allocation2 + $0x30] sm:$0xff] %v409
  %442 = vst [vmem:[#allocation2 + $0x38] sm:$0xff] %v410
  %443 = vst [vmem:[#allocation2 + $0x40] sm:$0xff] %v411
  %444 = vst [vmem:[#allocation2 + $0x48] sm:$0xff] %v412
  %445 = vst [vmem:[#allocation2 + $0x50] sm:$0xff] %v413
  %446 = vst [vmem:[#allocation2 + $0x58] sm:$0xff] %v414
  %447 = vst [vmem:[#allocation2 + $0x60] sm:$0xff] %v415
  %448 = vst [vmem:[#allocation2 + $0x68] sm:$0xff] %v416
  %449 = vst [vmem:[#allocation2 + $0x70] sm:$0xff] %v417
  %450 = vst [vmem:[#allocation2 + $0x78] sm:$0xff] %v418
  %451 = vst [vmem:[#allocation2 + $0x80] sm:$0xff] %v419
  %452 = vst [vmem:[#allocation2 + $0x88] sm:$0xff] %v420
  %453 = vst [vmem:[#allocation2 + $0x90] sm:$0xff] %v421
  %454 = vst [vmem:[#allocation2 + $0x98] sm:$0xff] %v422
  %455 = vst [vmem:[#allocation2 + $0xa0] sm:$0xff] %v423
  %456 = vst [vmem:[#allocation2 + $0xa8] sm:$0xff] %v424
  %457 = vst [vmem:[#allocation2 + $0xb0] sm:$0xff] %v425
  %458 = vst [vmem:[#allocation2 + $0xb8] sm:$0xff] %v426
  %459 = vst [vmem:[#allocation2 + $0xc0] sm:$0xff] %v427
  %460 = vst [vmem:[#allocation2 + $0xc8] sm:$0xff] %v428
  %461 = vst [vmem:[#allocation2 + $0xd0] sm:$0xff] %v429
  %462 = vst [vmem:[#allocation2 + $0xd8] sm:$0xff] %v430
  %463 = vst [vmem:[#allocation2 + $0xe0] sm:$0xff] %v431
  %464 = vst [vmem:[#allocation2 + $0xe8] sm:$0xff] %v432
  %465 = vst [vmem:[#allocation2 + $0xf0] sm:$0xff] %v433
  %466 = vst [vmem:[#allocation2 + $0xf8] sm:$0xff] %v434
  // Predicated region
  $region18: #{lightgcn_forward.5} parent=0 // pred_check
    %p467 = pneg %p14
  $region19: #{lightgcn_forward.5} parent=0 // pred_check_branch
    %469 = sbr.rel (%p467) target = $region21
  $region20: #{lightgcn_forward.5} parent=0 // pred_region
    %v470 = vld [vmem:[%s2] sm:$0xff]
    %v471 = vld [vmem:[%s2 + $0x8] sm:$0xff]
    %v472 = vld [vmem:[%s2 + $0x10] sm:$0xff]
    %v473 = vld [vmem:[%s2 + $0x18] sm:$0xff]
    %v474 = vld [vmem:[%s2 + $0x20] sm:$0xff]
    %v475 = vld [vmem:[%s2 + $0x28] sm:$0xff]
    %v476 = vld [vmem:[%s2 + $0x30] sm:$0xff]
    %v477 = vld [vmem:[%s2 + $0x38] sm:$0xff]
    %v478 = vld [vmem:[%s2 + $0x40] sm:$0xff]
    %v479 = vld [vmem:[%s2 + $0x48] sm:$0xff]
    %v480 = vld [vmem:[%s2 + $0x50] sm:$0xff]
    %v481 = vld [vmem:[%s2 + $0x58] sm:$0xff]
    %v482 = vld [vmem:[%s2 + $0x60] sm:$0xff]
    %v483 = vld [vmem:[%s2 + $0x68] sm:$0xff]
    %v484 = vld [vmem:[%s2 + $0x70] sm:$0xff]
    %v485 = vld [vmem:[%s2 + $0x78] sm:$0xff]
    %v486 = vld [vmem:[%s2 + $0x80] sm:$0xff]
    %v487 = vld [vmem:[%s2 + $0x88] sm:$0xff]
    %v488 = vld [vmem:[%s2 + $0x90] sm:$0xff]
    %v489 = vld [vmem:[%s2 + $0x98] sm:$0xff]
    %v490 = vld [vmem:[%s2 + $0xa0] sm:$0xff]
    %v491 = vld [vmem:[%s2 + $0xa8] sm:$0xff]
    %v492 = vld [vmem:[%s2 + $0xb0] sm:$0xff]
    %v493 = vld [vmem:[%s2 + $0xb8] sm:$0xff]
    %v494 = vld [vmem:[%s2 + $0xc0] sm:$0xff]
    %v495 = vld [vmem:[%s2 + $0xc8] sm:$0xff]
    %v496 = vld [vmem:[%s2 + $0xd0] sm:$0xff]
    %v497 = vld [vmem:[%s2 + $0xd8] sm:$0xff]
    %v498 = vld [vmem:[%s2 + $0xe0] sm:$0xff]
    %v499 = vld [vmem:[%s2 + $0xe8] sm:$0xff]
    %v500 = vld [vmem:[%s2 + $0xf0] sm:$0xff]
    %v501 = vld [vmem:[%s2 + $0xf8] sm:$0xff]
    %v502 = vld [vmem:[#allocation2] sm:$0xff]
    %v503 = vld [vmem:[#allocation2 + $0x8] sm:$0xff]
    %v504 = vld [vmem:[#allocation2 + $0x10] sm:$0xff]
    %v505 = vld [vmem:[#allocation2 + $0x18] sm:$0xff]
    %v506 = vld [vmem:[#allocation2 + $0x20] sm:$0xff]
    %v507 = vld [vmem:[#allocation2 + $0x28] sm:$0xff]
    %v508 = vld [vmem:[#allocation2 + $0x30] sm:$0xff]
    %v509 = vld [vmem:[#allocation2 + $0x38] sm:$0xff]
    %v510 = vld [vmem:[#allocation2 + $0x40] sm:$0xff]
    %v511 = vld [vmem:[#allocation2 + $0x48] sm:$0xff]
    %v512 = vld [vmem:[#allocation2 + $0x50] sm:$0xff]
    %v513 = vld [vmem:[#allocation2 + $0x58] sm:$0xff]
    %v514 = vld [vmem:[#allocation2 + $0x60] sm:$0xff]
    %v515 = vld [vmem:[#allocation2 + $0x68] sm:$0xff]
    %v516 = vld [vmem:[#allocation2 + $0x70] sm:$0xff]
    %v517 = vld [vmem:[#allocation2 + $0x78] sm:$0xff]
    %v518 = vld [vmem:[#allocation2 + $0x80] sm:$0xff]
    %v519 = vld [vmem:[#allocation2 + $0x88] sm:$0xff]
    %v520 = vld [vmem:[#allocation2 + $0x90] sm:$0xff]
    %v521 = vld [vmem:[#allocation2 + $0x98] sm:$0xff]
    %v522 = vld [vmem:[#allocation2 + $0xa0] sm:$0xff]
    %v523 = vld [vmem:[#allocation2 + $0xa8] sm:$0xff]
    %v524 = vld [vmem:[#allocation2 + $0xb0] sm:$0xff]
    %v525 = vld [vmem:[#allocation2 + $0xb8] sm:$0xff]
    %v526 = vld [vmem:[#allocation2 + $0xc0] sm:$0xff]
    %v527 = vld [vmem:[#allocation2 + $0xc8] sm:$0xff]
    %v528 = vld [vmem:[#allocation2 + $0xd0] sm:$0xff]
    %v529 = vld [vmem:[#allocation2 + $0xd8] sm:$0xff]
    %v530 = vld [vmem:[#allocation2 + $0xe0] sm:$0xff]
    %v531 = vld [vmem:[#allocation2 + $0xe8] sm:$0xff]
    %v532 = vld [vmem:[#allocation2 + $0xf0] sm:$0xff]
    %v533 = vld [vmem:[#allocation2 + $0xf8] sm:$0xff]
    %v534 = vadd.f32 %v470, %v502
    %v535 = vadd.f32 %v471, %v503
    %v536 = vadd.f32 %v472, %v504
    %v537 = vadd.f32 %v473, %v505
    %v538 = vadd.f32 %v474, %v506
    %v539 = vadd.f32 %v475, %v507
    %v540 = vadd.f32 %v476, %v508
    %v541 = vadd.f32 %v477, %v509
    %v542 = vadd.f32 %v478, %v510
    %v543 = vadd.f32 %v479, %v511
    %v544 = vadd.f32 %v480, %v512
    %v545 = vadd.f32 %v481, %v513
    %v546 = vadd.f32 %v482, %v514
    %v547 = vadd.f32 %v483, %v515
    %v548 = vadd.f32 %v484, %v516
    %v549 = vadd.f32 %v485, %v517
    %v550 = vadd.f32 %v486, %v518
    %v551 = vadd.f32 %v487, %v519
    %v552 = vadd.f32 %v488, %v520
    %v553 = vadd.f32 %v489, %v521
    %v554 = vadd.f32 %v490, %v522
    %v555 = vadd.f32 %v491, %v523
    %v556 = vadd.f32 %v492, %v524
    %v557 = vadd.f32 %v493, %v525
    %v558 = vadd.f32 %v494, %v526
    %v559 = vadd.f32 %v495, %v527
    %v560 = vadd.f32 %v496, %v528
    %v561 = vadd.f32 %v497, %v529
    %v562 = vadd.f32 %v498, %v530
    %v563 = vadd.f32 %v499, %v531
    %v564 = vadd.f32 %v500, %v532
    %v565 = vadd.f32 %v501, %v533
    %v566 = vmul.f32 %v534, 0.25
    %v567 = vmul.f32 %v535, 0.25
    %v568 = vmul.f32 %v536, 0.25
    %v569 = vmul.f32 %v537, 0.25
    %v570 = vmul.f32 %v538, 0.25
    %v571 = vmul.f32 %v539, 0.25
    %v572 = vmul.f32 %v540, 0.25
    %v573 = vmul.f32 %v541, 0.25
    %v574 = vmul.f32 %v542, 0.25
    %v575 = vmul.f32 %v543, 0.25
    %v576 = vmul.f32 %v544, 0.25
    %v577 = vmul.f32 %v545, 0.25
    %v578 = vmul.f32 %v546, 0.25
    %v579 = vmul.f32 %v547, 0.25
    %v580 = vmul.f32 %v548, 0.25
    %v581 = vmul.f32 %v549, 0.25
    %v582 = vmul.f32 %v550, 0.25
    %v583 = vmul.f32 %v551, 0.25
    %v584 = vmul.f32 %v552, 0.25
    %v585 = vmul.f32 %v553, 0.25
    %v586 = vmul.f32 %v554, 0.25
    %v587 = vmul.f32 %v555, 0.25
    %v588 = vmul.f32 %v556, 0.25
    %v589 = vmul.f32 %v557, 0.25
    %v590 = vmul.f32 %v558, 0.25
    %v591 = vmul.f32 %v559, 0.25
    %v592 = vmul.f32 %v560, 0.25
    %v593 = vmul.f32 %v561, 0.25
    %v594 = vmul.f32 %v562, 0.25
    %v595 = vmul.f32 %v563, 0.25
    %v596 = vmul.f32 %v564, 0.25
    %v597 = vmul.f32 %v565, 0.25
    %598 = vst [vmem:[%s3] sm:$0xff] %v566
    %599 = vst [vmem:[%s3 + $0x8] sm:$0xff] %v567
    %600 = vst [vmem:[%s3 + $0x10] sm:$0xff] %v568
    %601 = vst [vmem:[%s3 + $0x18] sm:$0xff] %v569
    %602 = vst [vmem:[%s3 + $0x20] sm:$0xff] %v570
    %603 = vst [vmem:[%s3 + $0x28] sm:$0xff] %v571
    %604 = vst [vmem:[%s3 + $0x30] sm:$0xff] %v572
    %605 = vst [vmem:[%s3 + $0x38] sm:$0xff] %v573
    %606 = vst [vmem:[%s3 + $0x40] sm:$0xff] %v574
    %607 = vst [vmem:[%s3 + $0x48] sm:$0xff] %v575
    %608 = vst [vmem:[%s3 + $0x50] sm:$0xff] %v576
    %609 = vst [vmem:[%s3 + $0x58] sm:$0xff] %v577
    %610 = vst [vmem:[%s3 + $0x60] sm:$0xff] %v578
    %611 = vst [vmem:[%s3 + $0x68] sm:$0xff] %v579
    %612 = vst [vmem:[%s3 + $0x70] sm:$0xff] %v580
    %613 = vst [vmem:[%s3 + $0x78] sm:$0xff] %v581
    %614 = vst [vmem:[%s3 + $0x80] sm:$0xff] %v582
    %615 = vst [vmem:[%s3 + $0x88] sm:$0xff] %v583
    %616 = vst [vmem:[%s3 + $0x90] sm:$0xff] %v584
    %617 = vst [vmem:[%s3 + $0x98] sm:$0xff] %v585
    %618 = vst [vmem:[%s3 + $0xa0] sm:$0xff] %v586
    %619 = vst [vmem:[%s3 + $0xa8] sm:$0xff] %v587
    %620 = vst [vmem:[%s3 + $0xb0] sm:$0xff] %v588
    %621 = vst [vmem:[%s3 + $0xb8] sm:$0xff] %v589
    %622 = vst [vmem:[%s3 + $0xc0] sm:$0xff] %v590
    %623 = vst [vmem:[%s3 + $0xc8] sm:$0xff] %v591
    %624 = vst [vmem:[%s3 + $0xd0] sm:$0xff] %v592
    %625 = vst [vmem:[%s3 + $0xd8] sm:$0xff] %v593
    %626 = vst [vmem:[%s3 + $0xe0] sm:$0xff] %v594
    %627 = vst [vmem:[%s3 + $0xe8] sm:$0xff] %v595
    %628 = vst [vmem:[%s3 + $0xf0] sm:$0xff] %v596
    %629 = vst [vmem:[%s3 + $0xf8] sm:$0xff] %v597
  $region21: #{lightgcn_forward.5} parent=0 // pred_fallthru
    _
  // Predicated region
  $region22: #{lightgcn_forward.5} parent=0 // pred_check
    _
  $region23: #{lightgcn_forward.5} parent=0 // pred_check_branch
    %631 = sbr.rel (0) target = $region25
  $region24: #{lightgcn_forward.5} parent=0 // pred_region
    _
  $region25: #{lightgcn_forward.5} parent=0 // pred_fallthru
    _
  // Predicated region
  $region26: #{lightgcn_forward.5} parent=0 // pred_check
    _
  $region27: #{lightgcn_forward.5} parent=0 // pred_check_branch
    %633 = sbr.rel (0) target = $region29
  $region28: #{lightgcn_forward.5} parent=0 // pred_region
    _
  $region29: #{lightgcn_forward.5} parent=0 // pred_fallthru
    _

// kernel: lightgcn_forward.3
$region0: #{lightgcn_forward.3}
  #allocation0 [shape = 'u32[]', space=smem, size = 0x4, offset = 0x4, fixed_abs, tag = 'smem constant byte address 0x4 - core index']
  #allocation1 [shape = 'u32[144,128]{1,0:T(1,128)}', space=vmem, size = 0x12000, scoped, tag = 'internal scratch']
  #allocation2 [shape = 'f32[256,128]{1,0:T(8,128)}', space=vmem, size = 0x20000, scoped, tag = 'scratch operand']
  %s0 = inlined_call_operand.vmem [shape: f32[256,256], index: 0, kind: input, shape index: {}]
  %s1 = inlined_call_operand.vmem [shape: f32[256,128], index: 1, kind: input, shape index: {}, may-alias: {1,2}]
  %s2 = inlined_call_operand.vmem [shape: f32[256,128], index: 2, kind: input, shape index: {}, may-alias: {1,2}]
  %s3 = inlined_call_operand.vmem [shape: f32[256,128], index: 3, kind: output, shape index: {0}]
  %s4 = inlined_call_operand.vmem [shape: f32[256,128], index: 4, kind: output, shape index: {1}]
  %5 = xla_tuple %s3, %s4
  %s6 = sld [smem:[#allocation0]]
  $region38: #{lightgcn_forward.3} parent=0
    _
  %s8 = ssub.s32 1, %s6
  %s9 = scalar_select 0, %s8, %s6
  // Predicated region
  $region2: #{lightgcn_forward.3} parent=0 // pred_check
    _
  $region3: #{lightgcn_forward.3} parent=0 // pred_check_branch
    %11 = sbr.rel (0) target = $region5
  $region4: #{lightgcn_forward.3} parent=0 // pred_region
    _
  $region5: #{lightgcn_forward.3} parent=0 // pred_fallthru
    _
  // Predicated region
  $region6: #{lightgcn_forward.3} parent=0 // pred_check
    _
  $region7: #{lightgcn_forward.3} parent=0 // pred_check_branch
    %13 = sbr.rel (0) target = $region9
  $region8: #{lightgcn_forward.3} parent=0 // pred_region
    _
  $region9: #{lightgcn_forward.3} parent=0 // pred_fallthru
    _
  // Predicated region
  $region10: #{lightgcn_forward.3} parent=0 // pred_check
    _
  $region11: #{lightgcn_forward.3} parent=0 // pred_check_branch
    %15 = sbr.rel (0) target = $region13
  $region12: #{lightgcn_forward.3} parent=0 // pred_region
    _
  $region13: #{lightgcn_forward.3} parent=0 // pred_fallthru
    _
  %p16 = scmp.eq.s32.totalorder 0, 0
  // Predicated region
  $region14: #{lightgcn_forward.3} parent=0 // pred_check
    %p17 = pneg %p16
  $region15: #{lightgcn_forward.3} parent=0 // pred_check_branch
    %19 = sbr.rel (%p17) target = $region17
  $region16: #{lightgcn_forward.3} parent=0 // pred_region
    %20 = vst [vmem:[#allocation2] sm:$0xff] 0.0
    %21 = vst [vmem:[#allocation2 + $0x8] sm:$0xff] 0.0
    %22 = vst [vmem:[#allocation2 + $0x10] sm:$0xff] 0.0
    %23 = vst [vmem:[#allocation2 + $0x18] sm:$0xff] 0.0
    %24 = vst [vmem:[#allocation2 + $0x20] sm:$0xff] 0.0
    %25 = vst [vmem:[#allocation2 + $0x28] sm:$0xff] 0.0
    %26 = vst [vmem:[#allocation2 + $0x30] sm:$0xff] 0.0
    %27 = vst [vmem:[#allocation2 + $0x38] sm:$0xff] 0.0
    %28 = vst [vmem:[#allocation2 + $0x40] sm:$0xff] 0.0
    %29 = vst [vmem:[#allocation2 + $0x48] sm:$0xff] 0.0
    %30 = vst [vmem:[#allocation2 + $0x50] sm:$0xff] 0.0
    %31 = vst [vmem:[#allocation2 + $0x58] sm:$0xff] 0.0
    %32 = vst [vmem:[#allocation2 + $0x60] sm:$0xff] 0.0
    %33 = vst [vmem:[#allocation2 + $0x68] sm:$0xff] 0.0
    %34 = vst [vmem:[#allocation2 + $0x70] sm:$0xff] 0.0
    %35 = vst [vmem:[#allocation2 + $0x78] sm:$0xff] 0.0
    %36 = vst [vmem:[#allocation2 + $0x80] sm:$0xff] 0.0
    %37 = vst [vmem:[#allocation2 + $0x88] sm:$0xff] 0.0
    %38 = vst [vmem:[#allocation2 + $0x90] sm:$0xff] 0.0
    %39 = vst [vmem:[#allocation2 + $0x98] sm:$0xff] 0.0
    %40 = vst [vmem:[#allocation2 + $0xa0] sm:$0xff] 0.0
    %41 = vst [vmem:[#allocation2 + $0xa8] sm:$0xff] 0.0
    %42 = vst [vmem:[#allocation2 + $0xb0] sm:$0xff] 0.0
    %43 = vst [vmem:[#allocation2 + $0xb8] sm:$0xff] 0.0
    %44 = vst [vmem:[#allocation2 + $0xc0] sm:$0xff] 0.0
    %45 = vst [vmem:[#allocation2 + $0xc8] sm:$0xff] 0.0
    %46 = vst [vmem:[#allocation2 + $0xd0] sm:$0xff] 0.0
    %47 = vst [vmem:[#allocation2 + $0xd8] sm:$0xff] 0.0
    %48 = vst [vmem:[#allocation2 + $0xe0] sm:$0xff] 0.0
    %49 = vst [vmem:[#allocation2 + $0xe8] sm:$0xff] 0.0
    %50 = vst [vmem:[#allocation2 + $0xf0] sm:$0xff] 0.0
    %51 = vst [vmem:[#allocation2 + $0xf8] sm:$0xff] 0.0
  $region17: #{lightgcn_forward.3} parent=0 // pred_fallthru
    _
  %v52 = vld [vmem:[#allocation2] sm:$0xff]
  %v53 = vld [vmem:[#allocation2 + $0x8] sm:$0xff]
  %v54 = vld [vmem:[#allocation2 + $0x10] sm:$0xff]
  %v55 = vld [vmem:[#allocation2 + $0x18] sm:$0xff]
  %v56 = vld [vmem:[#allocation2 + $0x20] sm:$0xff]
  %v57 = vld [vmem:[#allocation2 + $0x28] sm:$0xff]
  %v58 = vld [vmem:[#allocation2 + $0x30] sm:$0xff]
  %v59 = vld [vmem:[#allocation2 + $0x38] sm:$0xff]
  %v60 = vld [vmem:[#allocation2 + $0x40] sm:$0xff]
  %v61 = vld [vmem:[#allocation2 + $0x48] sm:$0xff]
  %v62 = vld [vmem:[#allocation2 + $0x50] sm:$0xff]
  %v63 = vld [vmem:[#allocation2 + $0x58] sm:$0xff]
  %v64 = vld [vmem:[#allocation2 + $0x60] sm:$0xff]
  %v65 = vld [vmem:[#allocation2 + $0x68] sm:$0xff]
  %v66 = vld [vmem:[#allocation2 + $0x70] sm:$0xff]
  %v67 = vld [vmem:[#allocation2 + $0x78] sm:$0xff]
  %v68 = vld [vmem:[#allocation2 + $0x80] sm:$0xff]
  %v69 = vld [vmem:[#allocation2 + $0x88] sm:$0xff]
  %v70 = vld [vmem:[#allocation2 + $0x90] sm:$0xff]
  %v71 = vld [vmem:[#allocation2 + $0x98] sm:$0xff]
  %v72 = vld [vmem:[#allocation2 + $0xa0] sm:$0xff]
  %v73 = vld [vmem:[#allocation2 + $0xa8] sm:$0xff]
  %v74 = vld [vmem:[#allocation2 + $0xb0] sm:$0xff]
  %v75 = vld [vmem:[#allocation2 + $0xb8] sm:$0xff]
  %v76 = vld [vmem:[#allocation2 + $0xc0] sm:$0xff]
  %v77 = vld [vmem:[#allocation2 + $0xc8] sm:$0xff]
  %v78 = vld [vmem:[#allocation2 + $0xd0] sm:$0xff]
  %v79 = vld [vmem:[#allocation2 + $0xd8] sm:$0xff]
  %v80 = vld [vmem:[#allocation2 + $0xe0] sm:$0xff]
  %v81 = vld [vmem:[#allocation2 + $0xe8] sm:$0xff]
  %v82 = vld [vmem:[#allocation2 + $0xf0] sm:$0xff]
  %v83 = vld [vmem:[#allocation2 + $0xf8] sm:$0xff]
  %v84 = vld [vmem:[%s0] sm:$0xff]
  %v85 = vld [vmem:[%s0 + $0x8] sm:$0xff]
  %v86 = vld [vmem:[%s0 + $0x10] sm:$0xff]
  %v87 = vld [vmem:[%s0 + $0x18] sm:$0xff]
  %v88 = vld [vmem:[%s0 + $0x20] sm:$0xff]
  %v89 = vld [vmem:[%s0 + $0x28] sm:$0xff]
  %v90 = vld [vmem:[%s0 + $0x30] sm:$0xff]
  %v91 = vld [vmem:[%s0 + $0x38] sm:$0xff]
  %v92 = vld [vmem:[%s0 + $0x40] sm:$0xff]
  %v93 = vld [vmem:[%s0 + $0x48] sm:$0xff]
  %v94 = vld [vmem:[%s0 + $0x50] sm:$0xff]
  %v95 = vld [vmem:[%s0 + $0x58] sm:$0xff]
  %v96 = vld [vmem:[%s0 + $0x60] sm:$0xff]
  %v97 = vld [vmem:[%s0 + $0x68] sm:$0xff]
  %v98 = vld [vmem:[%s0 + $0x70] sm:$0xff]
  %v99 = vld [vmem:[%s0 + $0x78] sm:$0xff]
  %v100 = vld [vmem:[%s0 + $0x80] sm:$0xff]
  %v101 = vld [vmem:[%s0 + $0x88] sm:$0xff]
  %v102 = vld [vmem:[%s0 + $0x90] sm:$0xff]
  %v103 = vld [vmem:[%s0 + $0x98] sm:$0xff]
  %v104 = vld [vmem:[%s0 + $0xa0] sm:$0xff]
  %v105 = vld [vmem:[%s0 + $0xa8] sm:$0xff]
  %v106 = vld [vmem:[%s0 + $0xb0] sm:$0xff]
  %v107 = vld [vmem:[%s0 + $0xb8] sm:$0xff]
  %v108 = vld [vmem:[%s0 + $0xc0] sm:$0xff]
  %v109 = vld [vmem:[%s0 + $0xc8] sm:$0xff]
  %v110 = vld [vmem:[%s0 + $0xd0] sm:$0xff]
  %v111 = vld [vmem:[%s0 + $0xd8] sm:$0xff]
  %v112 = vld [vmem:[%s0 + $0xe0] sm:$0xff]
  %v113 = vld [vmem:[%s0 + $0xe8] sm:$0xff]
  %v114 = vld [vmem:[%s0 + $0xf0] sm:$0xff]
  %v115 = vld [vmem:[%s0 + $0xf8] sm:$0xff]
  %v116 = vld [vmem:[%s0 + $0x100] sm:$0xff]
  %v117 = vld [vmem:[%s0 + $0x108] sm:$0xff]
  %v118 = vld [vmem:[%s0 + $0x110] sm:$0xff]
  %v119 = vld [vmem:[%s0 + $0x118] sm:$0xff]
  %v120 = vld [vmem:[%s0 + $0x120] sm:$0xff]
  %v121 = vld [vmem:[%s0 + $0x128] sm:$0xff]
  %v122 = vld [vmem:[%s0 + $0x130] sm:$0xff]
  %v123 = vld [vmem:[%s0 + $0x138] sm:$0xff]
  %v124 = vld [vmem:[%s0 + $0x140] sm:$0xff]
  %v125 = vld [vmem:[%s0 + $0x148] sm:$0xff]
  %v126 = vld [vmem:[%s0 + $0x150] sm:$0xff]
  %v127 = vld [vmem:[%s0 + $0x158] sm:$0xff]
  %v128 = vld [vmem:[%s0 + $0x160] sm:$0xff]
  %v129 = vld [vmem:[%s0 + $0x168] sm:$0xff]
  %v130 = vld [vmem:[%s0 + $0x170] sm:$0xff]
  %v131 = vld [vmem:[%s0 + $0x178] sm:$0xff]
  %v132 = vld [vmem:[%s0 + $0x180] sm:$0xff]
  %v133 = vld [vmem:[%s0 + $0x188] sm:$0xff]
  %v134 = vld [vmem:[%s0 + $0x190] sm:$0xff]
  %v135 = vld [vmem:[%s0 + $0x198] sm:$0xff]
  %v136 = vld [vmem:[%s0 + $0x1a0] sm:$0xff]
  %v137 = vld [vmem:[%s0 + $0x1a8] sm:$0xff]
  %v138 = vld [vmem:[%s0 + $0x1b0] sm:$0xff]
  %v139 = vld [vmem:[%s0 + $0x1b8] sm:$0xff]
  %v140 = vld [vmem:[%s0 + $0x1c0] sm:$0xff]
  %v141 = vld [vmem:[%s0 + $0x1c8] sm:$0xff]
  %v142 = vld [vmem:[%s0 + $0x1d0] sm:$0xff]
  %v143 = vld [vmem:[%s0 + $0x1d8] sm:$0xff]
  %v144 = vld [vmem:[%s0 + $0x1e0] sm:$0xff]
  %v145 = vld [vmem:[%s0 + $0x1e8] sm:$0xff]
  %v146 = vld [vmem:[%s0 + $0x1f0] sm:$0xff]
  %v147 = vld [vmem:[%s0 + $0x1f8] sm:$0xff]
  %v148 = vld [vmem:[%s1] sm:$0xff]
  %v149 = vld [vmem:[%s1 + $0x8] sm:$0xff]
  %v150 = vld [vmem:[%s1 + $0x10] sm:$0xff]
  %v151 = vld [vmem:[%s1 + $0x18] sm:$0xff]
  %v152 = vld [vmem:[%s1 + $0x20] sm:$0xff]
  %v153 = vld [vmem:[%s1 + $0x28] sm:$0xff]
  %v154 = vld [vmem:[%s1 + $0x30] sm:$0xff]
  %v155 = vld [vmem:[%s1 + $0x38] sm:$0xff]
  %v156 = vld [vmem:[%s1 + $0x40] sm:$0xff]
  %v157 = vld [vmem:[%s1 + $0x48] sm:$0xff]
  %v158 = vld [vmem:[%s1 + $0x50] sm:$0xff]
  %v159 = vld [vmem:[%s1 + $0x58] sm:$0xff]
  %v160 = vld [vmem:[%s1 + $0x60] sm:$0xff]
  %v161 = vld [vmem:[%s1 + $0x68] sm:$0xff]
  %v162 = vld [vmem:[%s1 + $0x70] sm:$0xff]
  %v163 = vld [vmem:[%s1 + $0x78] sm:$0xff]
  %v164 = vld [vmem:[%s1 + $0x80] sm:$0xff]
  %v165 = vld [vmem:[%s1 + $0x88] sm:$0xff]
  %v166 = vld [vmem:[%s1 + $0x90] sm:$0xff]
  %v167 = vld [vmem:[%s1 + $0x98] sm:$0xff]
  %v168 = vld [vmem:[%s1 + $0xa0] sm:$0xff]
  %v169 = vld [vmem:[%s1 + $0xa8] sm:$0xff]
  %v170 = vld [vmem:[%s1 + $0xb0] sm:$0xff]
  %v171 = vld [vmem:[%s1 + $0xb8] sm:$0xff]
  %v172 = vld [vmem:[%s1 + $0xc0] sm:$0xff]
  %v173 = vld [vmem:[%s1 + $0xc8] sm:$0xff]
  %v174 = vld [vmem:[%s1 + $0xd0] sm:$0xff]
  %v175 = vld [vmem:[%s1 + $0xd8] sm:$0xff]
  %v176 = vld [vmem:[%s1 + $0xe0] sm:$0xff]
  %v177 = vld [vmem:[%s1 + $0xe8] sm:$0xff]
  %v178 = vld [vmem:[%s1 + $0xf0] sm:$0xff]
  %v179 = vld [vmem:[%s1 + $0xf8] sm:$0xff]
  %180 = vmatprep.subr.mxu0 0.0
  %181 = vmatpush1.msra.mxu0 %v163
  %182 = vmatprep.subr.mxu0 0.0
  %183 = vmatpush1.msra.mxu0 %v162
  %184 = vmatprep.subr.mxu0 0.0
  %185 = vmatpush1.msra.mxu0 %v161
  %186 = vmatprep.subr.mxu0 0.0
  %187 = vmatpush1.msra.mxu0 %v160
  %188 = vmatprep.subr.mxu0 0.0
  %189 = vmatpush1.msra.mxu0 %v159
  %190 = vmatprep.subr.mxu0 0.0
  %191 = vmatpush1.msra.mxu0 %v158
  %192 = vmatprep.subr.mxu0 0.0
  %193 = vmatpush1.msra.mxu0 %v157
  %194 = vmatprep.subr.mxu0 0.0
  %195 = vmatpush1.msra.mxu0 %v156
  %196 = vmatprep.subr.mxu0 0.0
  %197 = vmatpush1.msra.mxu0 %v155
  %198 = vmatprep.subr.mxu0 0.0
  %199 = vmatpush1.msra.mxu0 %v154
  %200 = vmatprep.subr.mxu0 0.0
  %201 = vmatpush1.msra.mxu0 %v153
  %202 = vmatprep.subr.mxu0 0.0
  %203 = vmatpush1.msra.mxu0 %v152
  %204 = vmatprep.subr.mxu0 0.0
  %205 = vmatpush1.msra.mxu0 %v151
  %206 = vmatprep.subr.mxu0 0.0
  %207 = vmatpush1.msra.mxu0 %v150
  %208 = vmatprep.subr.mxu0 0.0
  %209 = vmatpush1.msra.mxu0 %v149
  %210 = vmatprep.subr.mxu0 0.0
  %211 = vmatpush1.msra.mxu0 %v148
  %212 = vmatprep.subr.mxu0 0.0
  %213 = vmatpush2.msra.mxu0 %v179
  %214 = vmatprep.subr.mxu0 0.0
  %215 = vmatpush2.msra.mxu0 %v178
  %216 = vmatprep.subr.mxu0 0.0
  %217 = vmatpush2.msra.mxu0 %v177
  %218 = vmatprep.subr.mxu0 0.0
  %219 = vmatpush2.msra.mxu0 %v176
  %220 = vmatprep.subr.mxu0 0.0
  %221 = vmatpush2.msra.mxu0 %v175
  %222 = vmatprep.subr.mxu0 0.0
  %223 = vmatpush2.msra.mxu0 %v174
  %224 = vmatprep.subr.mxu0 0.0
  %225 = vmatpush2.msra.mxu0 %v173
  %226 = vmatprep.subr.mxu0 0.0
  %227 = vmatpush2.msra.mxu0 %v172
  %228 = vmatprep.subr.mxu0 0.0
  %229 = vmatpush2.msra.mxu0 %v171
  %230 = vmatprep.subr.mxu0 0.0
  %231 = vmatpush2.msra.mxu0 %v170
  %232 = vmatprep.subr.mxu0 0.0
  %233 = vmatpush2.msra.mxu0 %v169
  %234 = vmatprep.subr.mxu0 0.0
  %235 = vmatpush2.msra.mxu0 %v168
  %236 = vmatprep.subr.mxu0 0.0
  %237 = vmatpush2.msra.mxu0 %v167
  %238 = vmatprep.subr.mxu0 0.0
  %239 = vmatpush2.msra.mxu0 %v166
  %240 = vmatprep.subr.mxu0 0.0
  %241 = vmatpush2.msra.mxu0 %v165
  %242 = vmatprep.subr.mxu0 0.0
  %243 = vmatpush2.msra.mxu0 %v164
  %244 = vmatprep.mubr.f32.mxu0 %v85
  %245 = vmatmul.mubr.f32.gmra.mxu0 %v84
  %v246 = vpop.f32.mrf.mxu0
  %v247 = vadd.f32 0.0, %v246
  %v248 = vpop.f32.mrf.mxu0
  %249 = vmatprep.mubr.f32.mxu0 %v87
  %250 = vmatmul.mubr.f32.gmra.mxu0 %v86
  %v251 = vpop.f32.mrf.mxu0
  %v252 = vadd.f32 0.0, %v251
  %v253 = vpop.f32.mrf.mxu0
  %254 = vmatprep.mubr.f32.mxu0 %v89
  %255 = vmatmul.mubr.f32.gmra.mxu0 %v88
  %v256 = vpop.f32.mrf.mxu0
  %v257 = vadd.f32 0.0, %v256
  %v258 = vpop.f32.mrf.mxu0
  %259 = vmatprep.mubr.f32.mxu0 %v91
  %260 = vmatmul.mubr.f32.gmra.mxu0 %v90
  %v261 = vpop.f32.mrf.mxu0
  %v262 = vadd.f32 0.0, %v261
  %v263 = vpop.f32.mrf.mxu0
  %264 = vmatprep.mubr.f32.mxu0 %v93
  %265 = vmatmul.mubr.f32.gmra.mxu0 %v92
  %v266 = vpop.f32.mrf.mxu0
  %v267 = vadd.f32 0.0, %v266
  %v268 = vpop.f32.mrf.mxu0
  %269 = vmatprep.mubr.f32.mxu0 %v95
  %270 = vmatmul.mubr.f32.gmra.mxu0 %v94
  %v271 = vpop.f32.mrf.mxu0
  %v272 = vadd.f32 0.0, %v271
  %v273 = vpop.f32.mrf.mxu0
  %274 = vmatprep.mubr.f32.mxu0 %v97
  %275 = vmatmul.mubr.f32.gmra.mxu0 %v96
  %v276 = vpop.f32.mrf.mxu0
  %v277 = vadd.f32 0.0, %v276
  %v278 = vpop.f32.mrf.mxu0
  %279 = vmatprep.mubr.f32.mxu0 %v99
  %280 = vmatmul.mubr.f32.gmra.mxu0 %v98
  %v281 = vpop.f32.mrf.mxu0
  %v282 = vadd.f32 0.0, %v281
  %v283 = vpop.f32.mrf.mxu0
  %284 = vmatprep.mubr.f32.mxu0 %v101
  %285 = vmatmul.mubr.f32.gmra.mxu0 %v100
  %v286 = vpop.f32.mrf.mxu0
  %v287 = vadd.f32 0.0, %v286
  %v288 = vpop.f32.mrf.mxu0
  %289 = vmatprep.mubr.f32.mxu0 %v103
  %290 = vmatmul.mubr.f32.gmra.mxu0 %v102
  %v291 = vpop.f32.mrf.mxu0
  %v292 = vadd.f32 0.0, %v291
  %v293 = vpop.f32.mrf.mxu0
  %294 = vmatprep.mubr.f32.mxu0 %v105
  %295 = vmatmul.mubr.f32.gmra.mxu0 %v104
  %v296 = vpop.f32.mrf.mxu0
  %v297 = vadd.f32 0.0, %v296
  %v298 = vpop.f32.mrf.mxu0
  %299 = vmatprep.mubr.f32.mxu0 %v107
  %300 = vmatmul.mubr.f32.gmra.mxu0 %v106
  %v301 = vpop.f32.mrf.mxu0
  %v302 = vadd.f32 0.0, %v301
  %v303 = vpop.f32.mrf.mxu0
  %304 = vmatprep.mubr.f32.mxu0 %v109
  %305 = vmatmul.mubr.f32.gmra.mxu0 %v108
  %v306 = vpop.f32.mrf.mxu0
  %v307 = vadd.f32 0.0, %v306
  %v308 = vpop.f32.mrf.mxu0
  %309 = vmatprep.mubr.f32.mxu0 %v111
  %310 = vmatmul.mubr.f32.gmra.mxu0 %v110
  %v311 = vpop.f32.mrf.mxu0
  %v312 = vadd.f32 0.0, %v311
  %v313 = vpop.f32.mrf.mxu0
  %314 = vmatprep.mubr.f32.mxu0 %v113
  %315 = vmatmul.mubr.f32.gmra.mxu0 %v112
  %v316 = vpop.f32.mrf.mxu0
  %v317 = vadd.f32 0.0, %v316
  %v318 = vpop.f32.mrf.mxu0
  %319 = vmatprep.mubr.f32.mxu0 %v115
  %320 = vmatmul.mubr.f32.gmra.mxu0 %v114
  %v321 = vpop.f32.mrf.mxu0
  %v322 = vadd.f32 0.0, %v321
  %v323 = vpop.f32.mrf.mxu0
  %324 = vmatprep.mubr.f32.mxu0 %v117
  %325 = vmatmul.mubr.f32.gmra.mxu0 %v116
  %v326 = vpop.f32.mrf.mxu0
  %v327 = vadd.f32 0.0, %v326
  %v328 = vpop.f32.mrf.mxu0
  %329 = vmatprep.mubr.f32.mxu0 %v119
  %330 = vmatmul.mubr.f32.gmra.mxu0 %v118
  %v331 = vpop.f32.mrf.mxu0
  %v332 = vadd.f32 0.0, %v331
  %v333 = vpop.f32.mrf.mxu0
  %334 = vmatprep.mubr.f32.mxu0 %v121
  %335 = vmatmul.mubr.f32.gmra.mxu0 %v120
  %v336 = vpop.f32.mrf.mxu0
  %v337 = vadd.f32 0.0, %v336
  %v338 = vpop.f32.mrf.mxu0
  %339 = vmatprep.mubr.f32.mxu0 %v123
  %340 = vmatmul.mubr.f32.gmra.mxu0 %v122
  %v341 = vpop.f32.mrf.mxu0
  %v342 = vadd.f32 0.0, %v341
  %v343 = vpop.f32.mrf.mxu0
  %344 = vmatprep.mubr.f32.mxu0 %v125
  %345 = vmatmul.mubr.f32.gmra.mxu0 %v124
  %v346 = vpop.f32.mrf.mxu0
  %v347 = vadd.f32 0.0, %v346
  %v348 = vpop.f32.mrf.mxu0
  %349 = vmatprep.mubr.f32.mxu0 %v127
  %350 = vmatmul.mubr.f32.gmra.mxu0 %v126
  %v351 = vpop.f32.mrf.mxu0
  %v352 = vadd.f32 0.0, %v351
  %v353 = vpop.f32.mrf.mxu0
  %354 = vmatprep.mubr.f32.mxu0 %v129
  %355 = vmatmul.mubr.f32.gmra.mxu0 %v128
  %v356 = vpop.f32.mrf.mxu0
  %v357 = vadd.f32 0.0, %v356
  %v358 = vpop.f32.mrf.mxu0
  %359 = vmatprep.mubr.f32.mxu0 %v131
  %360 = vmatmul.mubr.f32.gmra.mxu0 %v130
  %v361 = vpop.f32.mrf.mxu0
  %v362 = vadd.f32 0.0, %v361
  %v363 = vpop.f32.mrf.mxu0
  %364 = vmatprep.mubr.f32.mxu0 %v133
  %365 = vmatmul.mubr.f32.gmra.mxu0 %v132
  %v366 = vpop.f32.mrf.mxu0
  %v367 = vadd.f32 0.0, %v366
  %v368 = vpop.f32.mrf.mxu0
  %369 = vmatprep.mubr.f32.mxu0 %v135
  %370 = vmatmul.mubr.f32.gmra.mxu0 %v134
  %v371 = vpop.f32.mrf.mxu0
  %v372 = vadd.f32 0.0, %v371
  %v373 = vpop.f32.mrf.mxu0
  %374 = vmatprep.mubr.f32.mxu0 %v137
  %375 = vmatmul.mubr.f32.gmra.mxu0 %v136
  %v376 = vpop.f32.mrf.mxu0
  %v377 = vadd.f32 0.0, %v376
  %v378 = vpop.f32.mrf.mxu0
  %379 = vmatprep.mubr.f32.mxu0 %v139
  %380 = vmatmul.mubr.f32.gmra.mxu0 %v138
  %v381 = vpop.f32.mrf.mxu0
  %v382 = vadd.f32 0.0, %v381
  %v383 = vpop.f32.mrf.mxu0
  %384 = vmatprep.mubr.f32.mxu0 %v141
  %385 = vmatmul.mubr.f32.gmra.mxu0 %v140
  %v386 = vpop.f32.mrf.mxu0
  %v387 = vadd.f32 0.0, %v386
  %v388 = vpop.f32.mrf.mxu0
  %389 = vmatprep.mubr.f32.mxu0 %v143
  %390 = vmatmul.mubr.f32.gmra.mxu0 %v142
  %v391 = vpop.f32.mrf.mxu0
  %v392 = vadd.f32 0.0, %v391
  %v393 = vpop.f32.mrf.mxu0
  %394 = vmatprep.mubr.f32.mxu0 %v145
  %395 = vmatmul.mubr.f32.gmra.mxu0 %v144
  %v396 = vpop.f32.mrf.mxu0
  %v397 = vadd.f32 0.0, %v396
  %v398 = vpop.f32.mrf.mxu0
  %399 = vmatprep.mubr.f32.mxu0 %v147
  %400 = vmatmul.mubr.f32.gmra.mxu0 %v146
  %v401 = vpop.f32.mrf.mxu0
  %v402 = vadd.f32 0.0, %v401
  %v403 = vpop.f32.mrf.mxu0
  %404 = vdwg.mxu0
  %v405 = vadd.f32 %v52, %v247
  %v406 = vadd.f32 %v53, %v252
  %v407 = vadd.f32 %v54, %v257
  %v408 = vadd.f32 %v55, %v262
  %v409 = vadd.f32 %v56, %v267
  %v410 = vadd.f32 %v57, %v272
  %v411 = vadd.f32 %v58, %v277
  %v412 = vadd.f32 %v59, %v282
  %v413 = vadd.f32 %v60, %v287
  %v414 = vadd.f32 %v61, %v292
  %v415 = vadd.f32 %v62, %v297
  %v416 = vadd.f32 %v63, %v302
  %v417 = vadd.f32 %v64, %v307
  %v418 = vadd.f32 %v65, %v312
  %v419 = vadd.f32 %v66, %v317
  %v420 = vadd.f32 %v67, %v322
  %v421 = vadd.f32 %v68, %v327
  %v422 = vadd.f32 %v69, %v332
  %v423 = vadd.f32 %v70, %v337
  %v424 = vadd.f32 %v71, %v342
  %v425 = vadd.f32 %v72, %v347
  %v426 = vadd.f32 %v73, %v352
  %v427 = vadd.f32 %v74, %v357
  %v428 = vadd.f32 %v75, %v362
  %v429 = vadd.f32 %v76, %v367
  %v430 = vadd.f32 %v77, %v372
  %v431 = vadd.f32 %v78, %v377
  %v432 = vadd.f32 %v79, %v382
  %v433 = vadd.f32 %v80, %v387
  %v434 = vadd.f32 %v81, %v392
  %v435 = vadd.f32 %v82, %v397
  %v436 = vadd.f32 %v83, %v402
  %437 = vst [vmem:[#allocation2] sm:$0xff] %v405
  %438 = vst [vmem:[#allocation2 + $0x8] sm:$0xff] %v406
  %439 = vst [vmem:[#allocation2 + $0x10] sm:$0xff] %v407
  %440 = vst [vmem:[#allocation2 + $0x18] sm:$0xff] %v408
  %441 = vst [vmem:[#allocation2 + $0x20] sm:$0xff] %v409
  %442 = vst [vmem:[#allocation2 + $0x28] sm:$0xff] %v410
  %443 = vst [vmem:[#allocation2 + $0x30] sm:$0xff] %v411
  %444 = vst [vmem:[#allocation2 + $0x38] sm:$0xff] %v412
  %445 = vst [vmem:[#allocation2 + $0x40] sm:$0xff] %v413
  %446 = vst [vmem:[#allocation2 + $0x48] sm:$0xff] %v414
  %447 = vst [vmem:[#allocation2 + $0x50] sm:$0xff] %v415
  %448 = vst [vmem:[#allocation2 + $0x58] sm:$0xff] %v416
  %449 = vst [vmem:[#allocation2 + $0x60] sm:$0xff] %v417
  %450 = vst [vmem:[#allocation2 + $0x68] sm:$0xff] %v418
  %451 = vst [vmem:[#allocation2 + $0x70] sm:$0xff] %v419
  %452 = vst [vmem:[#allocation2 + $0x78] sm:$0xff] %v420
  %453 = vst [vmem:[#allocation2 + $0x80] sm:$0xff] %v421
  %454 = vst [vmem:[#allocation2 + $0x88] sm:$0xff] %v422
  %455 = vst [vmem:[#allocation2 + $0x90] sm:$0xff] %v423
  %456 = vst [vmem:[#allocation2 + $0x98] sm:$0xff] %v424
  %457 = vst [vmem:[#allocation2 + $0xa0] sm:$0xff] %v425
  %458 = vst [vmem:[#allocation2 + $0xa8] sm:$0xff] %v426
  %459 = vst [vmem:[#allocation2 + $0xb0] sm:$0xff] %v427
  %460 = vst [vmem:[#allocation2 + $0xb8] sm:$0xff] %v428
  %461 = vst [vmem:[#allocation2 + $0xc0] sm:$0xff] %v429
  %462 = vst [vmem:[#allocation2 + $0xc8] sm:$0xff] %v430
  %463 = vst [vmem:[#allocation2 + $0xd0] sm:$0xff] %v431
  %464 = vst [vmem:[#allocation2 + $0xd8] sm:$0xff] %v432
  %465 = vst [vmem:[#allocation2 + $0xe0] sm:$0xff] %v433
  %466 = vst [vmem:[#allocation2 + $0xe8] sm:$0xff] %v434
  %467 = vst [vmem:[#allocation2 + $0xf0] sm:$0xff] %v435
  %468 = vst [vmem:[#allocation2 + $0xf8] sm:$0xff] %v436
  // Predicated region
  $region18: #{lightgcn_forward.3} parent=0 // pred_check
    %p469 = pneg %p16
  $region19: #{lightgcn_forward.3} parent=0 // pred_check_branch
    %471 = sbr.rel (%p469) target = $region21
  $region20: #{lightgcn_forward.3} parent=0 // pred_region
    %v472 = vld [vmem:[#allocation2] sm:$0xff]
    %v473 = vld [vmem:[#allocation2 + $0x8] sm:$0xff]
    %v474 = vld [vmem:[#allocation2 + $0x10] sm:$0xff]
    %v475 = vld [vmem:[#allocation2 + $0x18] sm:$0xff]
    %v476 = vld [vmem:[#allocation2 + $0x20] sm:$0xff]
    %v477 = vld [vmem:[#allocation2 + $0x28] sm:$0xff]
    %v478 = vld [vmem:[#allocation2 + $0x30] sm:$0xff]
    %v479 = vld [vmem:[#allocation2 + $0x38] sm:$0xff]
    %v480 = vld [vmem:[#allocation2 + $0x40] sm:$0xff]
    %v481 = vld [vmem:[#allocation2 + $0x48] sm:$0xff]
    %v482 = vld [vmem:[#allocation2 + $0x50] sm:$0xff]
    %v483 = vld [vmem:[#allocation2 + $0x58] sm:$0xff]
    %v484 = vld [vmem:[#allocation2 + $0x60] sm:$0xff]
    %v485 = vld [vmem:[#allocation2 + $0x68] sm:$0xff]
    %v486 = vld [vmem:[#allocation2 + $0x70] sm:$0xff]
    %v487 = vld [vmem:[#allocation2 + $0x78] sm:$0xff]
    %v488 = vld [vmem:[#allocation2 + $0x80] sm:$0xff]
    %v489 = vld [vmem:[#allocation2 + $0x88] sm:$0xff]
    %v490 = vld [vmem:[#allocation2 + $0x90] sm:$0xff]
    %v491 = vld [vmem:[#allocation2 + $0x98] sm:$0xff]
    %v492 = vld [vmem:[#allocation2 + $0xa0] sm:$0xff]
    %v493 = vld [vmem:[#allocation2 + $0xa8] sm:$0xff]
    %v494 = vld [vmem:[#allocation2 + $0xb0] sm:$0xff]
    %v495 = vld [vmem:[#allocation2 + $0xb8] sm:$0xff]
    %v496 = vld [vmem:[#allocation2 + $0xc0] sm:$0xff]
    %v497 = vld [vmem:[#allocation2 + $0xc8] sm:$0xff]
    %v498 = vld [vmem:[#allocation2 + $0xd0] sm:$0xff]
    %v499 = vld [vmem:[#allocation2 + $0xd8] sm:$0xff]
    %v500 = vld [vmem:[#allocation2 + $0xe0] sm:$0xff]
    %v501 = vld [vmem:[#allocation2 + $0xe8] sm:$0xff]
    %v502 = vld [vmem:[#allocation2 + $0xf0] sm:$0xff]
    %v503 = vld [vmem:[#allocation2 + $0xf8] sm:$0xff]
    %504 = vst [vmem:[%s3] sm:$0xff] %v472
    %505 = vst [vmem:[%s3 + $0x8] sm:$0xff] %v473
    %506 = vst [vmem:[%s3 + $0x10] sm:$0xff] %v474
    %507 = vst [vmem:[%s3 + $0x18] sm:$0xff] %v475
    %508 = vst [vmem:[%s3 + $0x20] sm:$0xff] %v476
    %509 = vst [vmem:[%s3 + $0x28] sm:$0xff] %v477
    %510 = vst [vmem:[%s3 + $0x30] sm:$0xff] %v478
    %511 = vst [vmem:[%s3 + $0x38] sm:$0xff] %v479
    %512 = vst [vmem:[%s3 + $0x40] sm:$0xff] %v480
    %513 = vst [vmem:[%s3 + $0x48] sm:$0xff] %v481
    %514 = vst [vmem:[%s3 + $0x50] sm:$0xff] %v482
    %515 = vst [vmem:[%s3 + $0x58] sm:$0xff] %v483
    %516 = vst [vmem:[%s3 + $0x60] sm:$0xff] %v484
    %517 = vst [vmem:[%s3 + $0x68] sm:$0xff] %v485
    %518 = vst [vmem:[%s3 + $0x70] sm:$0xff] %v486
    %519 = vst [vmem:[%s3 + $0x78] sm:$0xff] %v487
    %520 = vst [vmem:[%s3 + $0x80] sm:$0xff] %v488
    %521 = vst [vmem:[%s3 + $0x88] sm:$0xff] %v489
    %522 = vst [vmem:[%s3 + $0x90] sm:$0xff] %v490
    %523 = vst [vmem:[%s3 + $0x98] sm:$0xff] %v491
    %524 = vst [vmem:[%s3 + $0xa0] sm:$0xff] %v492
    %525 = vst [vmem:[%s3 + $0xa8] sm:$0xff] %v493
    %526 = vst [vmem:[%s3 + $0xb0] sm:$0xff] %v494
    %527 = vst [vmem:[%s3 + $0xb8] sm:$0xff] %v495
    %528 = vst [vmem:[%s3 + $0xc0] sm:$0xff] %v496
    %529 = vst [vmem:[%s3 + $0xc8] sm:$0xff] %v497
    %530 = vst [vmem:[%s3 + $0xd0] sm:$0xff] %v498
    %531 = vst [vmem:[%s3 + $0xd8] sm:$0xff] %v499
    %532 = vst [vmem:[%s3 + $0xe0] sm:$0xff] %v500
    %533 = vst [vmem:[%s3 + $0xe8] sm:$0xff] %v501
    %534 = vst [vmem:[%s3 + $0xf0] sm:$0xff] %v502
    %535 = vst [vmem:[%s3 + $0xf8] sm:$0xff] %v503
    %v536 = vld [vmem:[%s2] sm:$0xff]
    %v537 = vld [vmem:[%s2 + $0x8] sm:$0xff]
    %v538 = vld [vmem:[%s2 + $0x10] sm:$0xff]
    %v539 = vld [vmem:[%s2 + $0x18] sm:$0xff]
    %v540 = vld [vmem:[%s2 + $0x20] sm:$0xff]
    %v541 = vld [vmem:[%s2 + $0x28] sm:$0xff]
    %v542 = vld [vmem:[%s2 + $0x30] sm:$0xff]
    %v543 = vld [vmem:[%s2 + $0x38] sm:$0xff]
    %v544 = vld [vmem:[%s2 + $0x40] sm:$0xff]
    %v545 = vld [vmem:[%s2 + $0x48] sm:$0xff]
    %v546 = vld [vmem:[%s2 + $0x50] sm:$0xff]
    %v547 = vld [vmem:[%s2 + $0x58] sm:$0xff]
    %v548 = vld [vmem:[%s2 + $0x60] sm:$0xff]
    %v549 = vld [vmem:[%s2 + $0x68] sm:$0xff]
    %v550 = vld [vmem:[%s2 + $0x70] sm:$0xff]
    %v551 = vld [vmem:[%s2 + $0x78] sm:$0xff]
    %v552 = vld [vmem:[%s2 + $0x80] sm:$0xff]
    %v553 = vld [vmem:[%s2 + $0x88] sm:$0xff]
    %v554 = vld [vmem:[%s2 + $0x90] sm:$0xff]
    %v555 = vld [vmem:[%s2 + $0x98] sm:$0xff]
    %v556 = vld [vmem:[%s2 + $0xa0] sm:$0xff]
    %v557 = vld [vmem:[%s2 + $0xa8] sm:$0xff]
    %v558 = vld [vmem:[%s2 + $0xb0] sm:$0xff]
    %v559 = vld [vmem:[%s2 + $0xb8] sm:$0xff]
    %v560 = vld [vmem:[%s2 + $0xc0] sm:$0xff]
    %v561 = vld [vmem:[%s2 + $0xc8] sm:$0xff]
    %v562 = vld [vmem:[%s2 + $0xd0] sm:$0xff]
    %v563 = vld [vmem:[%s2 + $0xd8] sm:$0xff]
    %v564 = vld [vmem:[%s2 + $0xe0] sm:$0xff]
    %v565 = vld [vmem:[%s2 + $0xe8] sm:$0xff]
    %v566 = vld [vmem:[%s2 + $0xf0] sm:$0xff]
    %v567 = vld [vmem:[%s2 + $0xf8] sm:$0xff]
    %v568 = vadd.f32 %v536, %v472
    %v569 = vadd.f32 %v537, %v473
    %v570 = vadd.f32 %v538, %v474
    %v571 = vadd.f32 %v539, %v475
    %v572 = vadd.f32 %v540, %v476
    %v573 = vadd.f32 %v541, %v477
    %v574 = vadd.f32 %v542, %v478
    %v575 = vadd.f32 %v543, %v479
    %v576 = vadd.f32 %v544, %v480
    %v577 = vadd.f32 %v545, %v481
    %v578 = vadd.f32 %v546, %v482
    %v579 = vadd.f32 %v547, %v483
    %v580 = vadd.f32 %v548, %v484
    %v581 = vadd.f32 %v549, %v485
    %v582 = vadd.f32 %v550, %v486
    %v583 = vadd.f32 %v551, %v487
    %v584 = vadd.f32 %v552, %v488
    %v585 = vadd.f32 %v553, %v489
    %v586 = vadd.f32 %v554, %v490
    %v587 = vadd.f32 %v555, %v491
    %v588 = vadd.f32 %v556, %v492
    %v589 = vadd.f32 %v557, %v493
    %v590 = vadd.f32 %v558, %v494
    %v591 = vadd.f32 %v559, %v495
    %v592 = vadd.f32 %v560, %v496
    %v593 = vadd.f32 %v561, %v497
    %v594 = vadd.f32 %v562, %v498
    %v595 = vadd.f32 %v563, %v499
    %v596 = vadd.f32 %v564, %v500
    %v597 = vadd.f32 %v565, %v501
    %v598 = vadd.f32 %v566, %v502
    %v599 = vadd.f32 %v567, %v503
    %600 = vst [vmem:[%s4] sm:$0xff] %v568
    %601 = vst [vmem:[%s4 + $0x8] sm:$0xff] %v569
    %602 = vst [vmem:[%s4 + $0x10] sm:$0xff] %v570
    %603 = vst [vmem:[%s4 + $0x18] sm:$0xff] %v571
    %604 = vst [vmem:[%s4 + $0x20] sm:$0xff] %v572
    %605 = vst [vmem:[%s4 + $0x28] sm:$0xff] %v573
    %606 = vst [vmem:[%s4 + $0x30] sm:$0xff] %v574
    %607 = vst [vmem:[%s4 + $0x38] sm:$0xff] %v575
    %608 = vst [vmem:[%s4 + $0x40] sm:$0xff] %v576
    %609 = vst [vmem:[%s4 + $0x48] sm:$0xff] %v577
    %610 = vst [vmem:[%s4 + $0x50] sm:$0xff] %v578
    %611 = vst [vmem:[%s4 + $0x58] sm:$0xff] %v579
    %612 = vst [vmem:[%s4 + $0x60] sm:$0xff] %v580
    %613 = vst [vmem:[%s4 + $0x68] sm:$0xff] %v581
    %614 = vst [vmem:[%s4 + $0x70] sm:$0xff] %v582
    %615 = vst [vmem:[%s4 + $0x78] sm:$0xff] %v583
    %616 = vst [vmem:[%s4 + $0x80] sm:$0xff] %v584
    %617 = vst [vmem:[%s4 + $0x88] sm:$0xff] %v585
    %618 = vst [vmem:[%s4 + $0x90] sm:$0xff] %v586
    %619 = vst [vmem:[%s4 + $0x98] sm:$0xff] %v587
    %620 = vst [vmem:[%s4 + $0xa0] sm:$0xff] %v588
    %621 = vst [vmem:[%s4 + $0xa8] sm:$0xff] %v589
    %622 = vst [vmem:[%s4 + $0xb0] sm:$0xff] %v590
    %623 = vst [vmem:[%s4 + $0xb8] sm:$0xff] %v591
    %624 = vst [vmem:[%s4 + $0xc0] sm:$0xff] %v592
    %625 = vst [vmem:[%s4 + $0xc8] sm:$0xff] %v593
    %626 = vst [vmem:[%s4 + $0xd0] sm:$0xff] %v594
    %627 = vst [vmem:[%s4 + $0xd8] sm:$0xff] %v595
    %628 = vst [vmem:[%s4 + $0xe0] sm:$0xff] %v596
    %629 = vst [vmem:[%s4 + $0xe8] sm:$0xff] %v597
    %630 = vst [vmem:[%s4 + $0xf0] sm:$0xff] %v598
    %631 = vst [vmem:[%s4 + $0xf8] sm:$0xff] %v599
  $region21: #{lightgcn_forward.3} parent=0 // pred_fallthru
    _
  // Predicated region
  $region22: #{lightgcn_forward.3} parent=0 // pred_check
    _
  $region23: #{lightgcn_forward.3} parent=0 // pred_check_branch
    %633 = sbr.rel (0) target = $region25
  $region24: #{lightgcn_forward.3} parent=0 // pred_region
    _
  $region25: #{lightgcn_forward.3} parent=0 // pred_fallthru
    _
  // Predicated region
  $region26: #{lightgcn_forward.3} parent=0 // pred_check
    _
  $region27: #{lightgcn_forward.3} parent=0 // pred_check_branch
    %635 = sbr.rel (0) target = $region29
  $region28: #{lightgcn_forward.3} parent=0 // pred_region
    _
  $region29: #{lightgcn_forward.3} parent=0 // pred_fallthru
    _
  // Predicated region
  $region30: #{lightgcn_forward.3} parent=0 // pred_check
    _
  $region31: #{lightgcn_forward.3} parent=0 // pred_check_branch
    %637 = sbr.rel (0) target = $region33
  $region32: #{lightgcn_forward.3} parent=0 // pred_region
    _
  $region33: #{lightgcn_forward.3} parent=0 // pred_fallthru
    _
  // Predicated region
  $region34: #{lightgcn_forward.3} parent=0 // pred_check
    _
  $region35: #{lightgcn_forward.3} parent=0 // pred_check_branch
    %639 = sbr.rel (0) target = $region37
  $region36: #{lightgcn_forward.3} parent=0 // pred_region
    _
  $region37: #{lightgcn_forward.3} parent=0 // pred_fallthru
    _

</llo_original>
